<compile_context>
chip_gen: v7x
topology: tpu7x:2x2x1
jax: 0.10.0
libtpu: 0.0.40
codegen_flags: <defaults>
</compile_context>

<pallas_src>
import math

import numpy as np
import jax
import jax.numpy as jnp
from jax.experimental import pallas as pl
from jax.experimental.pallas import tpu as pltpu

# ---- module hyper-parameters (layer_idx = 0) --------------------------------
D_MODEL = 32
NUM_HEADS = 8
HEAD_DIM = D_MODEL // NUM_HEADS
K_WINDOW = 16
BATCH = 2
SPARSITY_THRESHOLD = 0.5
EMOTION_DECAY = 0.9          # clamp(0.9 + 0.03 * layer_idx, 0.7, 0.98)
SHIFT_RESISTANCE = 0.3
ADAPTIVE_TAU = 1.0
LN_EPS = 1e-5

# ---- packed-slab layout ------------------------------------------------------
# wa : (32, 576)  — every weight with contraction dim K = 32, packed along lanes
WA_X0, WA_X1 = 0, 128        # [wqk | wmg_x | wmu | wem | wres | wtau | pad]
WA_C0, WA_C1 = 128, 192      # [wkk | wv]
WA_H0, WA_H1 = 192, 448      # [wffn1 | wsg | wg | pad]
WA_WO0, WA_WO1 = 448, 480    # W_o (kernel_alpha folded in)
WA_MGM0, WA_MGM1 = 480, 512  # memory_gate weight rows acting on m_mod
WA_WM0, WA_WM1 = 512, 544    # W_m
WA_HB0, WA_HB1 = 544, 576    # block-diagonal head-sum matrix (= hpool @ hexp)
# columns of the fused x-projection result
XC_QK0, XC_QK1 = 0, 32
XC_MG0, XC_MG1 = 32, 64
XC_MU0, XC_MU1 = 64, 96
XC_EM0, XC_EM1 = 96, 104
XC_RES, XC_TAU = 104, 105
# columns of the fused h_t-projection result
HC_FF0, HC_FF1 = 0, 128
HC_SG0, HC_SG1 = 128, 160
HC_G0, HC_G1 = 160, 192
# wb : (192, 32) — K = 64/128 weights stacked along sublanes
WB_MOD0, WB_MOD1 = 0, 64         # memory_modulator (acts on concat([m_prev, emotion_signal]))
WB_FFN2_0, WB_FFN2_1 = 64, 192   # ffn second linear
# wc8 : (8, 40) — emotion-space weights
WC_CLS0, WC_CLS1 = 0, 8
WC_MIX0, WC_MIX1 = 8, 40
# vec : (16, 256) — one bias / LayerNorm vector per row
VR_BX, VR_BC, VR_BH = 0, 1, 2
VR_BO, VR_BMOD, VR_BM, VR_BFFN2 = 3, 4, 5, 6
VR_BCLS, VR_BMIX = 7, 8
VR_LN1G, VR_LN1B, VR_LN2G, VR_LN2B, VR_LN3G, VR_LN3B = 9, 10, 11, 12, 13, 14
VEC_ROWS, VEC_COLS = 16, 256


def _dot(a, b):
    return jnp.dot(a, b, preferred_element_type=jnp.float32)


def _layernorm(x, g, b):
    mu = jnp.mean(x, axis=-1, keepdims=True)
    var = jnp.mean((x - mu) ** 2, axis=-1, keepdims=True)
    return (x - mu) * jax.lax.rsqrt(var + LN_EPS) * g + b


def ultra_chrono_fire_kernel(x_ref, ctx_ref, sel_ref, m_ref, emo_ref,
                             wa_ref, wb_ref, wc8_ref, vec_ref, out_ref):
    D = D_MODEL
    x = x_ref[...]            # (B, D)
    m_prev = m_ref[...]       # (B, D)
    emo_prev = emo_ref[...]   # (B, 8)

    def vrow(r, n):           # one packed bias / LN row
        return vec_ref[r:r + 1, 0:n]

    # ---- fused x-driven projections: one lane-dense matmul ------------------
    xa = _dot(x, wa_ref[:, WA_X0:WA_X1]) + vrow(VR_BX, 128)
    qk = jnp.maximum(xa[:, XC_QK0:XC_QK1], 0.0) + 1e-6      # kernelized query
    mg_x = xa[:, XC_MG0:XC_MG1]                             # x-part of memory_gate (+ bias)
    mu_pre = xa[:, XC_MU0:XC_MU1]                           # memory_update(x)
    em_pre = xa[:, XC_EM0:XC_EM1]                           # W_emotion(x)
    res_pre = xa[:, XC_RES:XC_RES + 1]                      # resistance_gate(x)
    tau_pre = xa[:, XC_TAU:XC_TAU + 1]                      # tau_gate(x)

    # ---- Kernelized (Fastformer-style) attention over masked fixed context --
    cp = _dot(ctx_ref[...], wa_ref[:, WA_C0:WA_C1]) + vrow(VR_BC, 64)
    kk = jnp.maximum(cp[:, 0:D], 0.0) + 1e-6                # (L*B, D)
    vp = cp[:, D:2 * D]                                     # (L*B, D)
    kkh = _dot(kk, wa_ref[:, WA_HB0:WA_HB1])                # per-head sum of kk features
    red = _dot(sel_ref[...], jnp.concatenate([kk * vp, kkh], axis=-1))   # (B, 64)
    kv_sum = red[:, 0:D]
    inv_norm = pl.reciprocal(red[:, D:2 * D] + 1e-6, approx=True)
    attn = qk * kv_sum * inv_norm                           # kernel_alpha folded into W_o
    h_temporal = _dot(attn, wa_ref[:, WA_WO0:WA_WO1]) + vrow(VR_BO, D)

    h_t = h_temporal * jax.nn.sigmoid(h_temporal) + x       # SiLU + residual
    h_t = _layernorm(h_t, vrow(VR_LN1G, D), vrow(VR_LN1B, D))

    # ---- Neuromodulation -----------------------------------------------------
    emotion_features = jnp.tanh(em_pre)
    logits = _dot(emotion_features, wc8_ref[:, WC_CLS0:WC_CLS1]) + vrow(VR_BCLS, 8)
    ez = jnp.exp(logits - jnp.max(logits, axis=-1, keepdims=True))
    proposed = ez * pl.reciprocal(jnp.sum(ez, axis=-1, keepdims=True), approx=True)
    dyn_res = jax.nn.sigmoid(res_pre) * SHIFT_RESISTANCE
    emo = (1.0 - dyn_res) * proposed + dyn_res * emo_prev
    emo = EMOTION_DECAY * emo_prev + (1.0 - EMOTION_DECAY) * emo
    emotion_signal = _dot(emo, wc8_ref[:, WC_MIX0:WC_MIX1]) + vrow(VR_BMIX, D)
    mem_gate_nm = jax.nn.sigmoid(
        _dot(jnp.concatenate([m_prev, emotion_signal], axis=-1),
             wb_ref[WB_MOD0:WB_MOD1, :]) + vrow(VR_BMOD, D))
    m_mod = (m_prev * (1.0 + 0.2 * jnp.tanh(emotion_signal))) * mem_gate_nm

    # ---- Event-triggered memory update ---------------------------------------
    dynamic_tau = ADAPTIVE_TAU * jax.nn.sigmoid(tau_pre)
    norm_signal = jnp.sqrt(jnp.sum(x * x, axis=-1, keepdims=True))
    memory_trigger = (norm_signal > dynamic_tau).astype(jnp.float32)
    memory_gate = jax.nn.sigmoid(mg_x + _dot(m_mod, wa_ref[:, WA_MGM0:WA_MGM1]))
    m_t = 0.9 * m_mod + 0.1 * (memory_gate * (mu_pre * memory_trigger))
    h_t = h_t + _dot(m_t, wa_ref[:, WA_WM0:WA_WM1]) + vrow(VR_BM, D)
    h_t = _layernorm(h_t, vrow(VR_LN2G, D), vrow(VR_LN2B, D))

    # ---- Sparse gated FFN (dropout = identity in eval) ------------------------
    hh = _dot(h_t, wa_ref[:, WA_H0:WA_H1]) + vrow(VR_BH, 256)
    ffn_pre = hh[:, HC_FF0:HC_FF1]
    # tanh-approx GELU (runs on EUP; tiny numeric delta vs exact-erf GELU)
    c0 = 0.7978845608028654  # sqrt(2/pi)
    ffn_act = 0.5 * ffn_pre * (1.0 + jnp.tanh(
        c0 * (ffn_pre + 0.044715 * ffn_pre * ffn_pre * ffn_pre)))
    ffn_out = _dot(ffn_act, wb_ref[WB_FFN2_0:WB_FFN2_1, :]) + vrow(VR_BFFN2, D)
    smask = (jax.nn.sigmoid(hh[:, HC_SG0:HC_SG1]) > SPARSITY_THRESHOLD).astype(jnp.float32)
    gate_vals = jax.nn.sigmoid(hh[:, HC_G0:HC_G1])
    y = _layernorm(h_t + gate_vals * (ffn_out * smask),
                   vrow(VR_LN3G, D), vrow(VR_LN3B, D))

    # single lane-dense (B, 128) output slab: [y | m_t | smask | emo | pad]
    pad = jnp.zeros((y.shape[0], 128 - 3 * D - 8), jnp.float32)
    out_ref[...] = jnp.concatenate([y, m_t, smask, emo, pad], axis=-1)


# ---------------------------- host-side glue ---------------------------------

def get_dilated_indices(current_idx, max_dilation=8, num_samples=8):
    indices = []
    dilation = 1
    for _ in range(num_samples):
        idx = current_idx - dilation
        if idx >= 0:
            indices.append(idx)
        dilation = min(dilation * 2, max_dilation)
    return indices[::-1]


def select_context(x_history, k_window):
    half = k_window // 2
    recent = x_history[-half:] if len(x_history) >= half else x_history
    if len(x_history) > half:
        idxs = get_dilated_indices(len(x_history) - 1, max_dilation=8, num_samples=half)
        dilated = [x_history[i] for i in idxs if i < len(x_history)]
    else:
        dilated = []
    return list(recent) + dilated


def init_params(key, d_model=D_MODEL, num_heads=NUM_HEADS):
    d4 = d_model // 4
    keys = iter(jax.random.split(key, 64))

    def lin(fin, fout):
        w = jax.random.normal(next(keys), (fin, fout), jnp.float32) / math.sqrt(fin)
        b = jax.random.normal(next(keys), (1, fout), jnp.float32) * 0.01
        return w, b

    p = {}
    # KernelizedAttention
    p['wqk'], p['bqk'] = lin(d_model, d_model)
    p['wkk'], p['bkk'] = lin(d_model, d_model)
    p['wv'], p['bv'] = lin(d_model, d_model)
    p['wo'], p['bo'] = lin(d_model, d_model)
    p['alpha'] = jnp.repeat(jnp.ones((num_heads,), jnp.float32), HEAD_DIM)     # (D,)
    # NeuromodulationUnit
    p['wem'], p['bem'] = lin(d_model, d4)
    p['wcls'], p['bcls'] = lin(d4, 8)
    p['wmix'], p['bmix'] = lin(8, d_model)
    p['wres'], p['bres'] = lin(d_model, 1)
    p['wmod'], p['bmod'] = lin(2 * d_model, d_model)
    p['pers'] = jax.random.normal(next(keys), (1, 8), jnp.float32) * 0.1
    # Block memory path
    wmg, p['bmg'] = lin(2 * d_model, d_model)
    p['wmg_x'], p['wmg_m'] = wmg[:d_model], wmg[d_model:]
    p['wmu'], p['bmu'] = lin(d_model, d_model)
    p['wm'], p['bm'] = lin(d_model, d_model)
    p['wtau'], p['btau'] = lin(d_model, 1)
    # LayerNorms
    for name in ('ln1', 'ln2', 'ln3'):
        p[name + 'g'] = jnp.ones((1, d_model), jnp.float32)
        p[name + 'b'] = jnp.zeros((1, d_model), jnp.float32)
    # FFN + gates
    p['wffn1'], p['bffn1'] = lin(d_model, 4 * d_model)
    p['wffn2'], p['bffn2'] = lin(4 * d_model, d_model)
    p['wsg'], p['bsg'] = lin(d_model, d_model)
    p['wg'], p['bg'] = lin(d_model, d_model)
    return p
    # NOTE: block-level W_q/W_k/W_v/W_o and memory_states_per_head are unused
    # on the kernelized-attention + non-empty-history path, matching PyTorch.


def pack_params(p):
    """Pack all parameters into 4 DMA slabs with fused / pre-folded weights."""
    D, f32 = D_MODEL, jnp.float32
    wx = jnp.concatenate([p['wqk'], p['wmg_x'], p['wmu'], p['wem'], p['wres'], p['wtau'],
                          jnp.zeros((D, 128 - (3 * D + 8 + 2)), f32)], axis=1)      # (D,128)
    wc = jnp.concatenate([p['wkk'], p['wv']], axis=1)                                # (D,64)
    wh = jnp.concatenate([p['wffn1'], p['wsg'], p['wg'],
                          jnp.zeros((D, 256 - 6 * D), f32)], axis=1)                 # (D,256)
    wo_eff = p['alpha'][:, None] * p['wo']                  # fold kernel_alpha into W_o
    head = jnp.arange(D) // HEAD_DIM
    hblock = (head[:, None] == head[None, :]).astype(f32)   # = hpool @ hexp
    wa = jnp.concatenate([wx, wc, wh, wo_eff, p['wmg_m'], p['wm'], hblock], axis=1)  # (D,576)
    wb = jnp.concatenate([p['wmod'], p['wffn2']], axis=0)                            # (192,D)
    wc8 = jnp.concatenate([p['wcls'], p['wmix']], axis=1)                            # (8,40)

    def row(*pieces):
        v = jnp.concatenate(pieces, axis=1)
        return jnp.pad(v, ((0, 0), (0, VEC_COLS - v.shape[1])))

    vec = jnp.concatenate([
        row(p['bqk'], p['bmg'], p['bmu'], p['bem'], p['bres'], p['btau']),   # VR_BX
        row(p['bkk'], p['bv']),                                              # VR_BC
        row(p['bffn1'], p['bsg'], p['bg']),                                  # VR_BH
        row(p['bo']), row(p['bmod']), row(p['bm']), row(p['bffn2']),
        row(p['bcls'] + p['pers']),                                          # personality folded
        row(p['bmix']),
        row(p['ln1g']), row(p['ln1b']),
        row(p['ln2g']), row(p['ln2b']),
        row(p['ln3g']), row(p['ln3b']),
        jnp.zeros((1, VEC_COLS), f32),                                       # pad to 16 rows
    ], axis=0)                                                               # (16,256)
    return wa, wb, wc8, vec


@jax.jit
def _device_step(x_t, ctx_tuple, sel, m_prev, emotion, packed):
    wa, wb, wc8, vec = packed
    B, D = x_t.shape
    ctx_flat = jnp.concatenate(ctx_tuple, axis=0)            # (K_WINDOW*B, D), row = l*B + b
    out = pl.pallas_call(
        ultra_chrono_fire_kernel,
        out_shape=jax.ShapeDtypeStruct((B, 128), jnp.float32),
        in_specs=[pl.BlockSpec(memory_space=pltpu.MemorySpace.VMEM)] * 9,
        out_specs=pl.BlockSpec(memory_space=pltpu.MemorySpace.VMEM),
    )(x_t, ctx_flat, sel, m_prev, emotion, wa, wb, wc8, vec)
    return out[:, 0:D], out[:, D:2 * D], out[:, 2 * D:3 * D], out[:, 3 * D:3 * D + 8]


def ultra_chrono_fire_block(x_t, states, packed, k_window=K_WINDOW):
    B, D = x_t.shape
    m_prev = states.get('memory', jnp.zeros((B, D), jnp.float32))
    x_history = states.get('history', [])
    emotion = states.get('emotion', jnp.zeros((B, 8), jnp.float32))

    context = select_context(x_history, k_window)
    # TODO(synk): empty-history fallback (h_temporal = W_q(x_t)) not wired into the kernel.
    assert context, "empty-history path not exercised in this synthetic kernel"
    L = len(context)
    # Fixed-shape context: always K_WINDOW rows-of-(B,D); validity encoded in `sel`
    # so the kernel compiles once for any history length.
    zeros_bd = jnp.zeros((B, D), jnp.float32)
    ctx_tuple = tuple(context) + (zeros_bd,) * (k_window - L)
    col = np.arange(k_window * B)
    sel = jnp.asarray(((col[None, :] % B == np.arange(B)[:, None])
                       & (col[None, :] // B < L)).astype(np.float32))        # (B, K_WINDOW*B)

    y_t, m_t, smask, emo_new = _device_step(x_t, ctx_tuple, sel, m_prev, emotion, packed)

    new_states = {
        'memory': m_t,
        'history': (x_history + [x_t])[-k_window:],
        'emotion': emo_new,
        'sparsity_stats': jnp.mean(smask),    # lazy device scalar — no per-step host sync
    }
    return y_t, new_states


if __name__ == "__main__":
    key = jax.random.PRNGKey(0)
    kp, kx, kh, km = jax.random.split(key, 4)
    params = init_params(kp)
    packed = pack_params(params)

    x_t = jax.random.normal(kx, (BATCH, D_MODEL), jnp.float32)
    # history length 10 > k_window//2 = 8 so both the recent window and the
    # dilated sampling path are exercised (context length L = 16).
    history = [jax.random.normal(jax.random.fold_in(kh, i), (BATCH, D_MODEL), jnp.float32)
               for i in range(10)]
    states = {
        'memory': jax.random.normal(km, (BATCH, D_MODEL), jnp.float32) * 0.1,
        'history': history,
        'emotion': jnp.ones((BATCH, 8), jnp.float32) / 8.0,
    }

    # Run a few recurrent steps: fixed shapes mean the jitted step (and the
    # pallas_call inside it) compiles exactly once.
    y_t = None
    for _ in range(3):
        y_t, states = ultra_chrono_fire_block(x_t, states, packed)
        x_t = y_t

    jax.block_until_ready(y_t)
    jax.block_until_ready(states['memory'])
    jax.block_until_ready(states['emotion'])
    assert y_t.shape == (BATCH, D_MODEL)
    assert states['memory'].shape == (BATCH, D_MODEL)
    assert states['emotion'].shape == (BATCH, 8)
    print("KERNEL_OK")
</pallas_src>

<mosaic_0001>
module attributes {stable_mosaic.version = 11 : i64} {
  func.func @ultra_chrono_fire_kernel(%arg0: memref<2x32xf32, #tpu.memory_space<vmem>>, %arg1: memref<32x32xf32, #tpu.memory_space<vmem>>, %arg2: memref<2x32xf32, #tpu.memory_space<vmem>>, %arg3: memref<2x32xf32, #tpu.memory_space<vmem>>, %arg4: memref<2x8xf32, #tpu.memory_space<vmem>>, %arg5: memref<32x576xf32, #tpu.memory_space<vmem>>, %arg6: memref<192x32xf32, #tpu.memory_space<vmem>>, %arg7: memref<8x40xf32, #tpu.memory_space<vmem>>, %arg8: memref<16x256xf32, #tpu.memory_space<vmem>>, %arg9: memref<2x128xf32, #tpu.memory_space<vmem>>) attributes {dimension_semantics = [], scalar_prefetch = 0 : i64, scratch_operands = 0 : i64, tpu.core_type = #tpu.core_type<tc>} {
    %c0 = arith.constant 0 : index
    %c0_0 = arith.constant 0 : index
    %0 = vector.load %arg0[%c0, %c0_0] : memref<2x32xf32, #tpu.memory_space<vmem>>, vector<2x32xf32>
    %c0_1 = arith.constant 0 : index
    %c0_2 = arith.constant 0 : index
    %1 = vector.load %arg3[%c0_1, %c0_2] : memref<2x32xf32, #tpu.memory_space<vmem>>, vector<2x32xf32>
    %c0_3 = arith.constant 0 : index
    %c0_4 = arith.constant 0 : index
    %2 = vector.load %arg4[%c0_3, %c0_4] : memref<2x8xf32, #tpu.memory_space<vmem>>, vector<2x8xf32>
    %c0_5 = arith.constant 0 : index
    %c0_6 = arith.constant 0 : index
    %3 = vector.load %arg5[%c0_5, %c0_6] : memref<32x576xf32, #tpu.memory_space<vmem>>, vector<32x128xf32>
    %cst = arith.constant dense<0.000000e+00> : vector<2x128xf32>
    %4 = tpu.matmul %0, %3, %cst {dimension_numbers = #tpu.dot_dimension_numbers<[1], [0], [0], [1], [0, 0, 1, 1], [], []>} : vector<2x32xf32>, vector<32x128xf32>, vector<2x128xf32> -> vector<2x128xf32>
    %c0_7 = arith.constant 0 : index
    %c0_8 = arith.constant 0 : index
    %5 = vector.load %arg8[%c0_7, %c0_8] : memref<16x256xf32, #tpu.memory_space<vmem>>, vector<1x128xf32>
    %6 = vector.broadcast %5 : vector<1x128xf32> to vector<2x128xf32>
    %7 = arith.addf %4, %6 : vector<2x128xf32>
    %8 = vector.extract_strided_slice %7 {offsets = [0, 0], sizes = [2, 32], strides = [1, 1]} : vector<2x128xf32> to vector<2x32xf32>
    %cst_9 = arith.constant 0.000000e+00 : f32
    %9 = vector.broadcast %cst_9 : f32 to vector<2x32xf32>
    %10 = arith.maximumf %8, %9 : vector<2x32xf32>
    %cst_10 = arith.constant 9.99999997E-7 : f32
    %11 = vector.broadcast %cst_10 : f32 to vector<2x32xf32>
    %12 = arith.addf %10, %11 : vector<2x32xf32>
    %13 = vector.extract_strided_slice %7 {offsets = [0, 32], sizes = [2, 32], strides = [1, 1]} : vector<2x128xf32> to vector<2x32xf32>
    %14 = vector.extract_strided_slice %7 {offsets = [0, 64], sizes = [2, 32], strides = [1, 1]} : vector<2x128xf32> to vector<2x32xf32>
    %15 = vector.extract_strided_slice %7 {offsets = [0, 96], sizes = [2, 8], strides = [1, 1]} : vector<2x128xf32> to vector<2x8xf32>
    %16 = vector.extract_strided_slice %7 {offsets = [0, 104], sizes = [2, 1], strides = [1, 1]} : vector<2x128xf32> to vector<2x1xf32>
    %17 = vector.extract_strided_slice %7 {offsets = [0, 105], sizes = [2, 1], strides = [1, 1]} : vector<2x128xf32> to vector<2x1xf32>
    %c0_11 = arith.constant 0 : index
    %c0_12 = arith.constant 0 : index
    %18 = vector.load %arg1[%c0_11, %c0_12] : memref<32x32xf32, #tpu.memory_space<vmem>>, vector<32x32xf32>
    %c0_13 = arith.constant 0 : index
    %c128 = arith.constant 128 : index
    %19 = vector.load %arg5[%c0_13, %c128] : memref<32x576xf32, #tpu.memory_space<vmem>>, vector<32x64xf32>
    %cst_14 = arith.constant dense<0.000000e+00> : vector<32x64xf32>
    %20 = tpu.matmul %18, %19, %cst_14 {dimension_numbers = #tpu.dot_dimension_numbers<[1], [0], [0], [1], [0, 0, 1, 1], [], []>} : vector<32x32xf32>, vector<32x64xf32>, vector<32x64xf32> -> vector<32x64xf32>
    %c1 = arith.constant 1 : index
    %c0_15 = arith.constant 0 : index
    %21 = vector.load %arg8[%c1, %c0_15] : memref<16x256xf32, #tpu.memory_space<vmem>>, vector<1x64xf32>
    %22 = vector.broadcast %21 : vector<1x64xf32> to vector<32x64xf32>
    %23 = arith.addf %20, %22 : vector<32x64xf32>
    %24 = vector.extract_strided_slice %23 {offsets = [0, 0], sizes = [32, 32], strides = [1, 1]} : vector<32x64xf32> to vector<32x32xf32>
    %cst_16 = arith.constant 0.000000e+00 : f32
    %25 = vector.broadcast %cst_16 : f32 to vector<32x32xf32>
    %26 = arith.maximumf %24, %25 : vector<32x32xf32>
    %cst_17 = arith.constant 9.99999997E-7 : f32
    %27 = vector.broadcast %cst_17 : f32 to vector<32x32xf32>
    %28 = arith.addf %26, %27 : vector<32x32xf32>
    %29 = vector.extract_strided_slice %23 {offsets = [0, 32], sizes = [32, 32], strides = [1, 1]} : vector<32x64xf32> to vector<32x32xf32>
    %c0_18 = arith.constant 0 : index
    %c544 = arith.constant 544 : index
    %30 = vector.load %arg5[%c0_18, %c544] : memref<32x576xf32, #tpu.memory_space<vmem>>, vector<32x32xf32>
    %cst_19 = arith.constant dense<0.000000e+00> : vector<32x32xf32>
    %31 = tpu.matmul %28, %30, %cst_19 {dimension_numbers = #tpu.dot_dimension_numbers<[1], [0], [0], [1], [0, 0, 1, 1], [], []>} : vector<32x32xf32>, vector<32x32xf32>, vector<32x32xf32> -> vector<32x32xf32>
    %c0_20 = arith.constant 0 : index
    %c0_21 = arith.constant 0 : index
    %32 = vector.load %arg2[%c0_20, %c0_21] : memref<2x32xf32, #tpu.memory_space<vmem>>, vector<2x32xf32>
    %33 = arith.mulf %28, %29 : vector<32x32xf32>
    %34 = tpu.concatenate %33, %31 in 1 : vector<32x32xf32>, vector<32x32xf32> -> vector<32x64xf32>
    %cst_22 = arith.constant dense<0.000000e+00> : vector<2x64xf32>
    %35 = tpu.matmul %32, %34, %cst_22 {dimension_numbers = #tpu.dot_dimension_numbers<[1], [0], [0], [1], [0, 0, 1, 1], [], []>} : vector<2x32xf32>, vector<32x64xf32>, vector<2x64xf32> -> vector<2x64xf32>
    %36 = vector.extract_strided_slice %35 {offsets = [0, 0], sizes = [2, 32], strides = [1, 1]} : vector<2x64xf32> to vector<2x32xf32>
    %37 = vector.extract_strided_slice %35 {offsets = [0, 32], sizes = [2, 32], strides = [1, 1]} : vector<2x64xf32> to vector<2x32xf32>
    %cst_23 = arith.constant 9.99999997E-7 : f32
    %38 = vector.broadcast %cst_23 : f32 to vector<2x32xf32>
    %39 = arith.addf %37, %38 : vector<2x32xf32>
    %40 = tpu.reciprocal %39 {approx = true} : vector<2x32xf32> -> vector<2x32xf32>
    %41 = arith.mulf %12, %36 : vector<2x32xf32>
    %42 = arith.mulf %41, %40 : vector<2x32xf32>
    %c0_24 = arith.constant 0 : index
    %c448 = arith.constant 448 : index
    %43 = vector.load %arg5[%c0_24, %c448] : memref<32x576xf32, #tpu.memory_space<vmem>>, vector<32x32xf32>
    %cst_25 = arith.constant dense<0.000000e+00> : vector<2x32xf32>
    %44 = tpu.matmul %42, %43, %cst_25 {dimension_numbers = #tpu.dot_dimension_numbers<[1], [0], [0], [1], [0, 0, 1, 1], [], []>} : vector<2x32xf32>, vector<32x32xf32>, vector<2x32xf32> -> vector<2x32xf32>
    %c3 = arith.constant 3 : index
    %c0_26 = arith.constant 0 : index
    %45 = vector.load %arg8[%c3, %c0_26] : memref<16x256xf32, #tpu.memory_space<vmem>>, vector<1x32xf32>
    %46 = vector.broadcast %45 : vector<1x32xf32> to vector<2x32xf32>
    %47 = arith.addf %44, %46 : vector<2x32xf32>
    %48 = arith.negf %47 : vector<2x32xf32>
    %49 = math.exp %48 : vector<2x32xf32>
    %cst_27 = arith.constant 1.000000e+00 : f32
    %50 = vector.broadcast %cst_27 : f32 to vector<2x32xf32>
    %51 = arith.addf %50, %49 : vector<2x32xf32>
    %52 = arith.divf %50, %51 : vector<2x32xf32>
    %53 = arith.mulf %47, %52 : vector<2x32xf32>
    %54 = arith.addf %53, %0 : vector<2x32xf32>
    %c9 = arith.constant 9 : index
    %c0_28 = arith.constant 0 : index
    %55 = vector.load %arg8[%c9, %c0_28] : memref<16x256xf32, #tpu.memory_space<vmem>>, vector<1x32xf32>
    %c10 = arith.constant 10 : index
    %c0_29 = arith.constant 0 : index
    %56 = vector.load %arg8[%c10, %c0_29] : memref<16x256xf32, #tpu.memory_space<vmem>>, vector<1x32xf32>
    %cst_30 = arith.constant dense<0.000000e+00> : vector<2xf32>
    %57 = vector.multi_reduction <add>, %54, %cst_30 [1] : vector<2x32xf32> to vector<2xf32>
    %58 = vector.shape_cast %57 : vector<2xf32> to vector<2x1xf32>
    %cst_31 = arith.constant 3.200000e+01 : f32
    %59 = vector.broadcast %cst_31 : f32 to vector<2x1xf32>
    %60 = arith.divf %58, %59 : vector<2x1xf32>
    %61 = vector.broadcast %60 : vector<2x1xf32> to vector<2x32xf32>
    %62 = arith.subf %54, %61 : vector<2x32xf32>
    %63 = arith.mulf %62, %62 : vector<2x32xf32>
    %cst_32 = arith.constant dense<0.000000e+00> : vector<2xf32>
    %64 = vector.multi_reduction <add>, %63, %cst_32 [1] : vector<2x32xf32> to vector<2xf32>
    %65 = vector.shape_cast %64 : vector<2xf32> to vector<2x1xf32>
    %cst_33 = arith.constant 3.200000e+01 : f32
    %66 = vector.broadcast %cst_33 : f32 to vector<2x1xf32>
    %67 = arith.divf %65, %66 : vector<2x1xf32>
    %68 = vector.broadcast %60 : vector<2x1xf32> to vector<2x32xf32>
    %69 = arith.subf %54, %68 : vector<2x32xf32>
    %cst_34 = arith.constant 9.99999974E-6 : f32
    %70 = vector.broadcast %cst_34 : f32 to vector<2x1xf32>
    %71 = arith.addf %67, %70 : vector<2x1xf32>
    %72 = math.rsqrt %71 : vector<2x1xf32>
    %73 = vector.broadcast %72 : vector<2x1xf32> to vector<2x32xf32>
    %74 = arith.mulf %69, %73 : vector<2x32xf32>
    %75 = vector.broadcast %55 : vector<1x32xf32> to vector<2x32xf32>
    %76 = arith.mulf %74, %75 : vector<2x32xf32>
    %77 = vector.broadcast %56 : vector<1x32xf32> to vector<2x32xf32>
    %78 = arith.addf %76, %77 : vector<2x32xf32>
    %79 = math.tanh %15 : vector<2x8xf32>
    %c0_35 = arith.constant 0 : index
    %c0_36 = arith.constant 0 : index
    %80 = vector.load %arg7[%c0_35, %c0_36] : memref<8x40xf32, #tpu.memory_space<vmem>>, vector<8x8xf32>
    %cst_37 = arith.constant dense<0.000000e+00> : vector<2x8xf32>
    %81 = tpu.matmul %79, %80, %cst_37 {dimension_numbers = #tpu.dot_dimension_numbers<[1], [0], [0], [1], [0, 0, 1, 1], [], []>} : vector<2x8xf32>, vector<8x8xf32>, vector<2x8xf32> -> vector<2x8xf32>
    %c7 = arith.constant 7 : index
    %c0_38 = arith.constant 0 : index
    %82 = vector.load %arg8[%c7, %c0_38] : memref<16x256xf32, #tpu.memory_space<vmem>>, vector<1x8xf32>
    %83 = vector.broadcast %82 : vector<1x8xf32> to vector<2x8xf32>
    %84 = arith.addf %81, %83 : vector<2x8xf32>
    %cst_39 = arith.constant dense<0xFF800000> : vector<2xf32>
    %85 = vector.multi_reduction <maximumf>, %84, %cst_39 [1] : vector<2x8xf32> to vector<2xf32>
    %86 = vector.shape_cast %85 : vector<2xf32> to vector<2x1xf32>
    %87 = vector.broadcast %86 : vector<2x1xf32> to vector<2x8xf32>
    %88 = arith.subf %84, %87 : vector<2x8xf32>
    %89 = math.exp %88 : vector<2x8xf32>
    %cst_40 = arith.constant dense<0.000000e+00> : vector<2xf32>
    %90 = vector.multi_reduction <add>, %89, %cst_40 [1] : vector<2x8xf32> to vector<2xf32>
    %91 = vector.shape_cast %90 : vector<2xf32> to vector<2x1xf32>
    %92 = tpu.reciprocal %91 {approx = true} : vector<2x1xf32> -> vector<2x1xf32>
    %93 = vector.broadcast %92 : vector<2x1xf32> to vector<2x8xf32>
    %94 = arith.mulf %89, %93 : vector<2x8xf32>
    %95 = arith.negf %16 : vector<2x1xf32>
    %96 = math.exp %95 : vector<2x1xf32>
    %cst_41 = arith.constant 1.000000e+00 : f32
    %97 = vector.broadcast %cst_41 : f32 to vector<2x1xf32>
    %98 = arith.addf %97, %96 : vector<2x1xf32>
    %99 = arith.divf %97, %98 : vector<2x1xf32>
    %cst_42 = arith.constant 3.000000e-01 : f32
    %100 = vector.broadcast %cst_42 : f32 to vector<2x1xf32>
    %101 = arith.mulf %99, %100 : vector<2x1xf32>
    %cst_43 = arith.constant 1.000000e+00 : f32
    %102 = vector.broadcast %cst_43 : f32 to vector<2x1xf32>
    %103 = arith.subf %102, %101 : vector<2x1xf32>
    %104 = vector.broadcast %103 : vector<2x1xf32> to vector<2x8xf32>
    %105 = arith.mulf %104, %94 : vector<2x8xf32>
    %106 = vector.broadcast %101 : vector<2x1xf32> to vector<2x8xf32>
    %107 = arith.mulf %106, %2 : vector<2x8xf32>
    %108 = arith.addf %105, %107 : vector<2x8xf32>
    %cst_44 = arith.constant 0.899999976 : f32
    %109 = vector.broadcast %cst_44 : f32 to vector<2x8xf32>
    %110 = arith.mulf %109, %2 : vector<2x8xf32>
    %cst_45 = arith.constant 1.000000e-01 : f32
    %111 = vector.broadcast %cst_45 : f32 to vector<2x8xf32>
    %112 = arith.mulf %111, %108 : vector<2x8xf32>
    %113 = arith.addf %110, %112 : vector<2x8xf32>
    %c0_46 = arith.constant 0 : index
    %c8 = arith.constant 8 : index
    %114 = vector.load %arg7[%c0_46, %c8] : memref<8x40xf32, #tpu.memory_space<vmem>>, vector<8x32xf32>
    %cst_47 = arith.constant dense<0.000000e+00> : vector<2x32xf32>
    %115 = tpu.matmul %113, %114, %cst_47 {dimension_numbers = #tpu.dot_dimension_numbers<[1], [0], [0], [1], [0, 0, 1, 1], [], []>} : vector<2x8xf32>, vector<8x32xf32>, vector<2x32xf32> -> vector<2x32xf32>
    %c8_48 = arith.constant 8 : index
    %c0_49 = arith.constant 0 : index
    %116 = vector.load %arg8[%c8_48, %c0_49] : memref<16x256xf32, #tpu.memory_space<vmem>>, vector<1x32xf32>
    %117 = vector.broadcast %116 : vector<1x32xf32> to vector<2x32xf32>
    %118 = arith.addf %115, %117 : vector<2x32xf32>
    %119 = tpu.concatenate %1, %118 in 1 : vector<2x32xf32>, vector<2x32xf32> -> vector<2x64xf32>
    %c0_50 = arith.constant 0 : index
    %c0_51 = arith.constant 0 : index
    %120 = vector.load %arg6[%c0_50, %c0_51] : memref<192x32xf32, #tpu.memory_space<vmem>>, vector<64x32xf32>
    %cst_52 = arith.constant dense<0.000000e+00> : vector<2x32xf32>
    %121 = tpu.matmul %119, %120, %cst_52 {dimension_numbers = #tpu.dot_dimension_numbers<[1], [0], [0], [1], [0, 0, 1, 1], [], []>} : vector<2x64xf32>, vector<64x32xf32>, vector<2x32xf32> -> vector<2x32xf32>
    %c4 = arith.constant 4 : index
    %c0_53 = arith.constant 0 : index
    %122 = vector.load %arg8[%c4, %c0_53] : memref<16x256xf32, #tpu.memory_space<vmem>>, vector<1x32xf32>
    %123 = vector.broadcast %122 : vector<1x32xf32> to vector<2x32xf32>
    %124 = arith.addf %121, %123 : vector<2x32xf32>
    %125 = arith.negf %124 : vector<2x32xf32>
    %126 = math.exp %125 : vector<2x32xf32>
    %cst_54 = arith.constant 1.000000e+00 : f32
    %127 = vector.broadcast %cst_54 : f32 to vector<2x32xf32>
    %128 = arith.addf %127, %126 : vector<2x32xf32>
    %129 = arith.divf %127, %128 : vector<2x32xf32>
    %130 = math.tanh %118 : vector<2x32xf32>
    %cst_55 = arith.constant 2.000000e-01 : f32
    %131 = vector.broadcast %cst_55 : f32 to vector<2x32xf32>
    %132 = arith.mulf %131, %130 : vector<2x32xf32>
    %cst_56 = arith.constant 1.000000e+00 : f32
    %133 = vector.broadcast %cst_56 : f32 to vector<2x32xf32>
    %134 = arith.addf %133, %132 : vector<2x32xf32>
    %135 = arith.mulf %1, %134 : vector<2x32xf32>
    %136 = arith.mulf %135, %129 : vector<2x32xf32>
    %137 = arith.negf %17 : vector<2x1xf32>
    %138 = math.exp %137 : vector<2x1xf32>
    %cst_57 = arith.constant 1.000000e+00 : f32
    %139 = vector.broadcast %cst_57 : f32 to vector<2x1xf32>
    %140 = arith.addf %139, %138 : vector<2x1xf32>
    %141 = arith.divf %139, %140 : vector<2x1xf32>
    %cst_58 = arith.constant 1.000000e+00 : f32
    %142 = vector.broadcast %cst_58 : f32 to vector<2x1xf32>
    %143 = arith.mulf %142, %141 : vector<2x1xf32>
    %144 = arith.mulf %0, %0 : vector<2x32xf32>
    %cst_59 = arith.constant dense<0.000000e+00> : vector<2xf32>
    %145 = vector.multi_reduction <add>, %144, %cst_59 [1] : vector<2x32xf32> to vector<2xf32>
    %146 = vector.shape_cast %145 : vector<2xf32> to vector<2x1xf32>
    %147 = math.sqrt %146 : vector<2x1xf32>
    %148 = arith.cmpf ogt, %147, %143 : vector<2x1xf32>
    %149 = arith.extui %148 : vector<2x1xi1> to vector<2x1xi32>
    %150 = arith.sitofp %149 : vector<2x1xi32> to vector<2x1xf32>
    %c0_60 = arith.constant 0 : index
    %c480 = arith.constant 480 : index
    %151 = vector.load %arg5[%c0_60, %c480] : memref<32x576xf32, #tpu.memory_space<vmem>>, vector<32x32xf32>
    %cst_61 = arith.constant dense<0.000000e+00> : vector<2x32xf32>
    %152 = tpu.matmul %136, %151, %cst_61 {dimension_numbers = #tpu.dot_dimension_numbers<[1], [0], [0], [1], [0, 0, 1, 1], [], []>} : vector<2x32xf32>, vector<32x32xf32>, vector<2x32xf32> -> vector<2x32xf32>
    %153 = arith.addf %13, %152 : vector<2x32xf32>
    %154 = arith.negf %153 : vector<2x32xf32>
    %155 = math.exp %154 : vector<2x32xf32>
    %cst_62 = arith.constant 1.000000e+00 : f32
    %156 = vector.broadcast %cst_62 : f32 to vector<2x32xf32>
    %157 = arith.addf %156, %155 : vector<2x32xf32>
    %158 = arith.divf %156, %157 : vector<2x32xf32>
    %cst_63 = arith.constant 0.899999976 : f32
    %159 = vector.broadcast %cst_63 : f32 to vector<2x32xf32>
    %160 = arith.mulf %159, %136 : vector<2x32xf32>
    %161 = vector.broadcast %150 : vector<2x1xf32> to vector<2x32xf32>
    %162 = arith.mulf %14, %161 : vector<2x32xf32>
    %163 = arith.mulf %158, %162 : vector<2x32xf32>
    %cst_64 = arith.constant 1.000000e-01 : f32
    %164 = vector.broadcast %cst_64 : f32 to vector<2x32xf32>
    %165 = arith.mulf %164, %163 : vector<2x32xf32>
    %166 = arith.addf %160, %165 : vector<2x32xf32>
    %c0_65 = arith.constant 0 : index
    %c512 = arith.constant 512 : index
    %167 = vector.load %arg5[%c0_65, %c512] : memref<32x576xf32, #tpu.memory_space<vmem>>, vector<32x32xf32>
    %cst_66 = arith.constant dense<0.000000e+00> : vector<2x32xf32>
    %168 = tpu.matmul %166, %167, %cst_66 {dimension_numbers = #tpu.dot_dimension_numbers<[1], [0], [0], [1], [0, 0, 1, 1], [], []>} : vector<2x32xf32>, vector<32x32xf32>, vector<2x32xf32> -> vector<2x32xf32>
    %169 = arith.addf %78, %168 : vector<2x32xf32>
    %c5 = arith.constant 5 : index
    %c0_67 = arith.constant 0 : index
    %170 = vector.load %arg8[%c5, %c0_67] : memref<16x256xf32, #tpu.memory_space<vmem>>, vector<1x32xf32>
    %171 = vector.broadcast %170 : vector<1x32xf32> to vector<2x32xf32>
    %172 = arith.addf %169, %171 : vector<2x32xf32>
    %c11 = arith.constant 11 : index
    %c0_68 = arith.constant 0 : index
    %173 = vector.load %arg8[%c11, %c0_68] : memref<16x256xf32, #tpu.memory_space<vmem>>, vector<1x32xf32>
    %c12 = arith.constant 12 : index
    %c0_69 = arith.constant 0 : index
    %174 = vector.load %arg8[%c12, %c0_69] : memref<16x256xf32, #tpu.memory_space<vmem>>, vector<1x32xf32>
    %cst_70 = arith.constant dense<0.000000e+00> : vector<2xf32>
    %175 = vector.multi_reduction <add>, %172, %cst_70 [1] : vector<2x32xf32> to vector<2xf32>
    %176 = vector.shape_cast %175 : vector<2xf32> to vector<2x1xf32>
    %cst_71 = arith.constant 3.200000e+01 : f32
    %177 = vector.broadcast %cst_71 : f32 to vector<2x1xf32>
    %178 = arith.divf %176, %177 : vector<2x1xf32>
    %179 = vector.broadcast %178 : vector<2x1xf32> to vector<2x32xf32>
    %180 = arith.subf %172, %179 : vector<2x32xf32>
    %181 = arith.mulf %180, %180 : vector<2x32xf32>
    %cst_72 = arith.constant dense<0.000000e+00> : vector<2xf32>
    %182 = vector.multi_reduction <add>, %181, %cst_72 [1] : vector<2x32xf32> to vector<2xf32>
    %183 = vector.shape_cast %182 : vector<2xf32> to vector<2x1xf32>
    %cst_73 = arith.constant 3.200000e+01 : f32
    %184 = vector.broadcast %cst_73 : f32 to vector<2x1xf32>
    %185 = arith.divf %183, %184 : vector<2x1xf32>
    %186 = vector.broadcast %178 : vector<2x1xf32> to vector<2x32xf32>
    %187 = arith.subf %172, %186 : vector<2x32xf32>
    %cst_74 = arith.constant 9.99999974E-6 : f32
    %188 = vector.broadcast %cst_74 : f32 to vector<2x1xf32>
    %189 = arith.addf %185, %188 : vector<2x1xf32>
    %190 = math.rsqrt %189 : vector<2x1xf32>
    %191 = vector.broadcast %190 : vector<2x1xf32> to vector<2x32xf32>
    %192 = arith.mulf %187, %191 : vector<2x32xf32>
    %193 = vector.broadcast %173 : vector<1x32xf32> to vector<2x32xf32>
    %194 = arith.mulf %192, %193 : vector<2x32xf32>
    %195 = vector.broadcast %174 : vector<1x32xf32> to vector<2x32xf32>
    %196 = arith.addf %194, %195 : vector<2x32xf32>
    %c0_75 = arith.constant 0 : index
    %c192 = arith.constant 192 : index
    %197 = vector.load %arg5[%c0_75, %c192] : memref<32x576xf32, #tpu.memory_space<vmem>>, vector<32x256xf32>
    %cst_76 = arith.constant dense<0.000000e+00> : vector<2x256xf32>
    %198 = tpu.matmul %196, %197, %cst_76 {dimension_numbers = #tpu.dot_dimension_numbers<[1], [0], [0], [1], [0, 0, 1, 1], [], []>} : vector<2x32xf32>, vector<32x256xf32>, vector<2x256xf32> -> vector<2x256xf32>
    %c2 = arith.constant 2 : index
    %c0_77 = arith.constant 0 : index
    %199 = vector.load %arg8[%c2, %c0_77] : memref<16x256xf32, #tpu.memory_space<vmem>>, vector<1x256xf32>
    %200 = vector.broadcast %199 : vector<1x256xf32> to vector<2x256xf32>
    %201 = arith.addf %198, %200 : vector<2x256xf32>
    %202 = vector.extract_strided_slice %201 {offsets = [0, 0], sizes = [2, 128], strides = [1, 1]} : vector<2x256xf32> to vector<2x128xf32>
    %cst_78 = arith.constant 5.000000e-01 : f32
    %203 = vector.broadcast %cst_78 : f32 to vector<2x128xf32>
    %204 = arith.mulf %203, %202 : vector<2x128xf32>
    %cst_79 = arith.constant 4.471500e-02 : f32
    %205 = vector.broadcast %cst_79 : f32 to vector<2x128xf32>
    %206 = arith.mulf %205, %202 : vector<2x128xf32>
    %207 = arith.mulf %206, %202 : vector<2x128xf32>
    %208 = arith.mulf %207, %202 : vector<2x128xf32>
    %209 = arith.addf %202, %208 : vector<2x128xf32>
    %cst_80 = arith.constant 0.797884583 : f32
    %210 = vector.broadcast %cst_80 : f32 to vector<2x128xf32>
    %211 = arith.mulf %210, %209 : vector<2x128xf32>
    %212 = math.tanh %211 : vector<2x128xf32>
    %cst_81 = arith.constant 1.000000e+00 : f32
    %213 = vector.broadcast %cst_81 : f32 to vector<2x128xf32>
    %214 = arith.addf %213, %212 : vector<2x128xf32>
    %215 = arith.mulf %204, %214 : vector<2x128xf32>
    %c64 = arith.constant 64 : index
    %c0_82 = arith.constant 0 : index
    %216 = vector.load %arg6[%c64, %c0_82] : memref<192x32xf32, #tpu.memory_space<vmem>>, vector<128x32xf32>
    %cst_83 = arith.constant dense<0.000000e+00> : vector<2x32xf32>
    %217 = tpu.matmul %215, %216, %cst_83 {dimension_numbers = #tpu.dot_dimension_numbers<[1], [0], [0], [1], [0, 0, 1, 1], [], []>} : vector<2x128xf32>, vector<128x32xf32>, vector<2x32xf32> -> vector<2x32xf32>
    %c6 = arith.constant 6 : index
    %c0_84 = arith.constant 0 : index
    %218 = vector.load %arg8[%c6, %c0_84] : memref<16x256xf32, #tpu.memory_space<vmem>>, vector<1x32xf32>
    %219 = vector.broadcast %218 : vector<1x32xf32> to vector<2x32xf32>
    %220 = arith.addf %217, %219 : vector<2x32xf32>
    %221 = vector.extract_strided_slice %201 {offsets = [0, 128], sizes = [2, 32], strides = [1, 1]} : vector<2x256xf32> to vector<2x32xf32>
    %222 = arith.negf %221 : vector<2x32xf32>
    %223 = math.exp %222 : vector<2x32xf32>
    %cst_85 = arith.constant 1.000000e+00 : f32
    %224 = vector.broadcast %cst_85 : f32 to vector<2x32xf32>
    %225 = arith.addf %224, %223 : vector<2x32xf32>
    %226 = arith.divf %224, %225 : vector<2x32xf32>
    %cst_86 = arith.constant 5.000000e-01 : f32
    %227 = vector.broadcast %cst_86 : f32 to vector<2x32xf32>
    %228 = arith.cmpf ogt, %226, %227 : vector<2x32xf32>
    %229 = arith.extui %228 : vector<2x32xi1> to vector<2x32xi32>
    %230 = arith.sitofp %229 : vector<2x32xi32> to vector<2x32xf32>
    %231 = vector.extract_strided_slice %201 {offsets = [0, 160], sizes = [2, 32], strides = [1, 1]} : vector<2x256xf32> to vector<2x32xf32>
    %232 = arith.negf %231 : vector<2x32xf32>
    %233 = math.exp %232 : vector<2x32xf32>
    %cst_87 = arith.constant 1.000000e+00 : f32
    %234 = vector.broadcast %cst_87 : f32 to vector<2x32xf32>
    %235 = arith.addf %234, %233 : vector<2x32xf32>
    %236 = arith.divf %234, %235 : vector<2x32xf32>
    %237 = arith.mulf %220, %230 : vector<2x32xf32>
    %238 = arith.mulf %236, %237 : vector<2x32xf32>
    %239 = arith.addf %196, %238 : vector<2x32xf32>
    %c13 = arith.constant 13 : index
    %c0_88 = arith.constant 0 : index
    %240 = vector.load %arg8[%c13, %c0_88] : memref<16x256xf32, #tpu.memory_space<vmem>>, vector<1x32xf32>
    %c14 = arith.constant 14 : index
    %c0_89 = arith.constant 0 : index
    %241 = vector.load %arg8[%c14, %c0_89] : memref<16x256xf32, #tpu.memory_space<vmem>>, vector<1x32xf32>
    %cst_90 = arith.constant dense<0.000000e+00> : vector<2xf32>
    %242 = vector.multi_reduction <add>, %239, %cst_90 [1] : vector<2x32xf32> to vector<2xf32>
    %243 = vector.shape_cast %242 : vector<2xf32> to vector<2x1xf32>
    %cst_91 = arith.constant 3.200000e+01 : f32
    %244 = vector.broadcast %cst_91 : f32 to vector<2x1xf32>
    %245 = arith.divf %243, %244 : vector<2x1xf32>
    %246 = vector.broadcast %245 : vector<2x1xf32> to vector<2x32xf32>
    %247 = arith.subf %239, %246 : vector<2x32xf32>
    %248 = arith.mulf %247, %247 : vector<2x32xf32>
    %cst_92 = arith.constant dense<0.000000e+00> : vector<2xf32>
    %249 = vector.multi_reduction <add>, %248, %cst_92 [1] : vector<2x32xf32> to vector<2xf32>
    %250 = vector.shape_cast %249 : vector<2xf32> to vector<2x1xf32>
    %cst_93 = arith.constant 3.200000e+01 : f32
    %251 = vector.broadcast %cst_93 : f32 to vector<2x1xf32>
    %252 = arith.divf %250, %251 : vector<2x1xf32>
    %253 = vector.broadcast %245 : vector<2x1xf32> to vector<2x32xf32>
    %254 = arith.subf %239, %253 : vector<2x32xf32>
    %cst_94 = arith.constant 9.99999974E-6 : f32
    %255 = vector.broadcast %cst_94 : f32 to vector<2x1xf32>
    %256 = arith.addf %252, %255 : vector<2x1xf32>
    %257 = math.rsqrt %256 : vector<2x1xf32>
    %258 = vector.broadcast %257 : vector<2x1xf32> to vector<2x32xf32>
    %259 = arith.mulf %254, %258 : vector<2x32xf32>
    %260 = vector.broadcast %240 : vector<1x32xf32> to vector<2x32xf32>
    %261 = arith.mulf %259, %260 : vector<2x32xf32>
    %262 = vector.broadcast %241 : vector<1x32xf32> to vector<2x32xf32>
    %263 = arith.addf %261, %262 : vector<2x32xf32>
    %cst_95 = arith.constant 0.000000e+00 : f32
    %264 = vector.broadcast %cst_95 : f32 to vector<2x24xf32>
    %265 = tpu.concatenate %263, %166, %230, %113, %264 in 1 : vector<2x32xf32>, vector<2x32xf32>, vector<2x32xf32>, vector<2x8xf32>, vector<2x24xf32> -> vector<2x128xf32>
    %c0_96 = arith.constant 0 : index
    %c0_97 = arith.constant 0 : index
    %266 = vector.load %arg9[%c0_96, %c0_97] : memref<2x128xf32, #tpu.memory_space<vmem>>, vector<2x128xf32>
    tpu.vector_store %arg9[%c0_96, %c0_97], %265 {strides = array<i32>} : memref<2x128xf32, #tpu.memory_space<vmem>>, vector<2x128xf32>,
    return
  }
}

</mosaic_0001>

<llo_original>
// kernel: _device_step.1
$region0: #{_device_step.1}
  #allocation0 [shape = 'u32[]', space=smem, size = 0x4, offset = 0x4, fixed_abs, tag = 'smem constant byte address 0x4 - core index']
  #allocation1 [shape = 'u32[144,128]{1,0:T(1,128)}', space=vmem, size = 0x12000, scoped, tag = 'internal scratch']
  %s0 = inlined_call_operand.vmem [shape: f32[2,32], index: 0, kind: input, shape index: {}]
  %s1 = inlined_call_operand.vmem [shape: f32[32,32], index: 1, kind: input, shape index: {}]
  %s2 = inlined_call_operand.vmem [shape: f32[2,32], index: 2, kind: input, shape index: {}]
  %s3 = inlined_call_operand.vmem [shape: f32[2,32], index: 3, kind: input, shape index: {}]
  %s4 = inlined_call_operand.vmem [shape: f32[2,8], index: 4, kind: input, shape index: {}]
  %s5 = inlined_call_operand.vmem [shape: f32[32,576], index: 5, kind: input, shape index: {}]
  %s6 = inlined_call_operand.vmem [shape: f32[192,32], index: 6, kind: input, shape index: {}]
  %s7 = inlined_call_operand.vmem [shape: f32[8,40], index: 7, kind: input, shape index: {}]
  %s8 = inlined_call_operand.vmem [shape: f32[16,256], index: 8, kind: input, shape index: {}]
  %s9 = inlined_call_operand.vmem [shape: f32[2,128], index: 9, kind: output, shape index: {}]
  %s10 = sld [smem:[#allocation0]]
  $region46: #{_device_step.1} parent=0
    _
  %s12 = ssub.s32 1, %s10
  %s13 = scalar_select 0, %s12, %s10
  // Predicated region
  $region2: #{_device_step.1} parent=0 // pred_check
    _
  $region3: #{_device_step.1} parent=0 // pred_check_branch
    %15 = sbr.rel (0) target = $region5
  $region4: #{_device_step.1} parent=0 // pred_region
    _
  $region5: #{_device_step.1} parent=0 // pred_fallthru
    _
  // Predicated region
  $region6: #{_device_step.1} parent=0 // pred_check
    _
  $region7: #{_device_step.1} parent=0 // pred_check_branch
    %17 = sbr.rel (0) target = $region9
  $region8: #{_device_step.1} parent=0 // pred_region
    _
  $region9: #{_device_step.1} parent=0 // pred_fallthru
    _
  // Predicated region
  $region10: #{_device_step.1} parent=0 // pred_check
    _
  $region11: #{_device_step.1} parent=0 // pred_check_branch
    %19 = sbr.rel (0) target = $region13
  $region12: #{_device_step.1} parent=0 // pred_region
    _
  $region13: #{_device_step.1} parent=0 // pred_fallthru
    _
  // Predicated region
  $region14: #{_device_step.1} parent=0 // pred_check
    _
  $region15: #{_device_step.1} parent=0 // pred_check_branch
    %21 = sbr.rel (0) target = $region17
  $region16: #{_device_step.1} parent=0 // pred_region
    _
  $region17: #{_device_step.1} parent=0 // pred_fallthru
    _
  // Predicated region
  $region18: #{_device_step.1} parent=0 // pred_check
    _
  $region19: #{_device_step.1} parent=0 // pred_check_branch
    %23 = sbr.rel (0) target = $region21
  $region20: #{_device_step.1} parent=0 // pred_region
    _
  $region21: #{_device_step.1} parent=0 // pred_fallthru
    _
  // Predicated region
  $region22: #{_device_step.1} parent=0 // pred_check
    _
  $region23: #{_device_step.1} parent=0 // pred_check_branch
    %25 = sbr.rel (0) target = $region25
  $region24: #{_device_step.1} parent=0 // pred_region
    _
  $region25: #{_device_step.1} parent=0 // pred_fallthru
    _
  // Predicated region
  $region26: #{_device_step.1} parent=0 // pred_check
    _
  $region27: #{_device_step.1} parent=0 // pred_check_branch
    %27 = sbr.rel (0) target = $region29
  $region28: #{_device_step.1} parent=0 // pred_region
    _
  $region29: #{_device_step.1} parent=0 // pred_fallthru
    _
  // Predicated region
  $region30: #{_device_step.1} parent=0 // pred_check
    _
  $region31: #{_device_step.1} parent=0 // pred_check_branch
    %29 = sbr.rel (0) target = $region33
  $region32: #{_device_step.1} parent=0 // pred_region
    _
  $region33: #{_device_step.1} parent=0 // pred_fallthru
    _
  // Predicated region
  $region34: #{_device_step.1} parent=0 // pred_check
    _
  $region35: #{_device_step.1} parent=0 // pred_check_branch
    %31 = sbr.rel (0) target = $region37
  $region36: #{_device_step.1} parent=0 // pred_region
    _
  $region37: #{_device_step.1} parent=0 // pred_fallthru
    _
  %v32 = vld [vmem:[%s0] sm:$0x3]
  %v33 = vld [vmem:[%s3] sm:$0x3]
  %v34 = vld [vmem:[%s4] sm:$0x3]
  %v35 = vld [vmem:[%s5] sm:$0xff]
  %v36 = vld [vmem:[%s5 + $0x28] sm:$0xff]
  %v37 = vld [vmem:[%s5 + $0x50] sm:$0xff]
  %v38 = vld [vmem:[%s5 + $0x78] sm:$0xff]
  %v39 = vld [vmem:[%s8] ss:$0 sm:$0xff]
  %vm40 = vcmask 261120
  %v42 = vsel %vm40, %v32, 0
  %44 = vmatprep.subr.mxu0 0.0
  %45 = vmatpush1.msra.mxu0 %v35
  %46 = vmatprep.subr.mxu0 0.0
  %47 = vmatpush1.msra.mxu0 %v36
  %48 = vmatprep.subr.mxu0 0.0
  %49 = vmatpush1.msra.mxu0 %v37
  %50 = vmatprep.subr.mxu0 0.0
  %51 = vmatpush1.msra.mxu0 %v38
  %52 = vmatprep.subr.mxu0 0.0
  %53 = vmatpush1.msra.mxu0 0.0
  %54 = vmatprep.subr.mxu0 0.0
  %55 = vmatpush1.msra.mxu0 0.0
  %56 = vmatprep.subr.mxu0 0.0
  %57 = vmatpush1.msra.mxu0 0.0
  %58 = vmatprep.subr.mxu0 0.0
  %59 = vmatpush1.msra.mxu0 0.0
  %60 = vmatprep.subr.mxu0 0.0
  %61 = vmatpush1.msra.mxu0 0.0
  %62 = vmatprep.subr.mxu0 0.0
  %63 = vmatpush1.msra.mxu0 0.0
  %64 = vmatprep.subr.mxu0 0.0
  %65 = vmatpush1.msra.mxu0 0.0
  %66 = vmatprep.subr.mxu0 0.0
  %67 = vmatpush1.msra.mxu0 0.0
  %68 = vmatprep.subr.mxu0 0.0
  %69 = vmatpush1.msra.mxu0 0.0
  %70 = vmatprep.subr.mxu0 0.0
  %71 = vmatpush1.msra.mxu0 0.0
  %72 = vmatprep.subr.mxu0 0.0
  %73 = vmatpush1.msra.mxu0 0.0
  %74 = vmatprep.subr.mxu0 0.0
  %75 = vmatpush1.msra.mxu0 0.0
  %76 = vmatprep.subr.mxu0 0.0
  %77 = vmatpush1.msra.mxu0 0.0
  %78 = vmatprep.subr.mxu0 0.0
  %79 = vmatpush1.msra.mxu0 0.0
  %80 = vmatprep.subr.mxu0 0.0
  %81 = vmatpush1.msra.mxu0 0.0
  %82 = vmatprep.subr.mxu0 0.0
  %83 = vmatpush1.msra.mxu0 0.0
  %84 = vmatprep.subr.mxu0 0.0
  %85 = vmatpush1.msra.mxu0 0.0
  %86 = vmatprep.subr.mxu0 0.0
  %87 = vmatpush1.msra.mxu0 0.0
  %88 = vmatprep.subr.mxu0 0.0
  %89 = vmatpush1.msra.mxu0 0.0
  %90 = vmatprep.subr.mxu0 0.0
  %91 = vmatpush1.msra.mxu0 0.0
  %92 = vmatprep.subr.mxu0 0.0
  %93 = vmatpush1.msra.mxu0 0.0
  %94 = vmatprep.subr.mxu0 0.0
  %95 = vmatpush1.msra.mxu0 0.0
  %96 = vmatprep.subr.mxu0 0.0
  %97 = vmatpush1.msra.mxu0 0.0
  %98 = vmatprep.subr.mxu0 0.0
  %99 = vmatpush1.msra.mxu0 0.0
  %100 = vmatprep.subr.mxu0 0.0
  %101 = vmatpush1.msra.mxu0 0.0
  %102 = vmatprep.subr.mxu0 0.0
  %103 = vmatpush1.msra.mxu0 0.0
  %104 = vmatprep.subr.mxu0 0.0
  %105 = vmatpush1.msra.mxu0 0.0
  %106 = vmatprep.subr.mxu0 0.0
  %107 = vmatpush1.msra.mxu0 0.0
  %108 = vmatprep.mubr.f32.mxu0 0.0
  %109 = vmatmul.mubr.f32.gmra.mrb[0].mxu0 %v42
  %v110 = vpop.f32.mrb[0].mxu0
  %v111 = vadd.f32 %v39, %v110
  %v112 = vpop.f32.mrb[0].mxu0
  %113 = vdwg.mxu0
  %v114 = vmax.f32 %v111, 0.0
  %v115 = vadd.f32 %v114, 1e-06
  %v116 = vld [vmem:[%s1] sm:$0xff]
  %v117 = vld [vmem:[%s1 + $0x8] sm:$0xff]
  %v118 = vld [vmem:[%s1 + $0x10] sm:$0xff]
  %v119 = vld [vmem:[%s1 + $0x18] sm:$0xff]
  %v120 = vld [vmem:[%s5 + $0x8] sm:$0xff]
  %v121 = vld [vmem:[%s5 + $0x30] sm:$0xff]
  %v122 = vld [vmem:[%s5 + $0x58] sm:$0xff]
  %v123 = vld [vmem:[%s5 + $0x80] sm:$0xff]
  %v124 = vld [vmem:[%s8 + $0x1] ss:$0 sm:$0xff]
  %v126 = vsel %vm40, %v116, 0
  %v129 = vsel %vm40, %v117, 0
  %v132 = vsel %vm40, %v118, 0
  %v135 = vsel %vm40, %v119, 0
  %137 = vmatprep.subr.mxu0 0.0
  %138 = vmatpush1.msra.mxu0 %v120
  %139 = vmatprep.subr.mxu0 0.0
  %140 = vmatpush1.msra.mxu0 %v121
  %141 = vmatprep.subr.mxu0 0.0
  %142 = vmatpush1.msra.mxu0 %v122
  %143 = vmatprep.subr.mxu0 0.0
  %144 = vmatpush1.msra.mxu0 %v123
  %145 = vmatprep.subr.mxu0 0.0
  %146 = vmatpush1.msra.mxu0 0.0
  %147 = vmatprep.subr.mxu0 0.0
  %148 = vmatpush1.msra.mxu0 0.0
  %149 = vmatprep.subr.mxu0 0.0
  %150 = vmatpush1.msra.mxu0 0.0
  %151 = vmatprep.subr.mxu0 0.0
  %152 = vmatpush1.msra.mxu0 0.0
  %153 = vmatprep.subr.mxu0 0.0
  %154 = vmatpush1.msra.mxu0 0.0
  %155 = vmatprep.subr.mxu0 0.0
  %156 = vmatpush1.msra.mxu0 0.0
  %157 = vmatprep.subr.mxu0 0.0
  %158 = vmatpush1.msra.mxu0 0.0
  %159 = vmatprep.subr.mxu0 0.0
  %160 = vmatpush1.msra.mxu0 0.0
  %161 = vmatprep.subr.mxu0 0.0
  %162 = vmatpush1.msra.mxu0 0.0
  %163 = vmatprep.subr.mxu0 0.0
  %164 = vmatpush1.msra.mxu0 0.0
  %165 = vmatprep.subr.mxu0 0.0
  %166 = vmatpush1.msra.mxu0 0.0
  %167 = vmatprep.subr.mxu0 0.0
  %168 = vmatpush1.msra.mxu0 0.0
  %169 = vmatprep.subr.mxu0 0.0
  %170 = vmatpush1.msra.mxu0 0.0
  %171 = vmatprep.subr.mxu0 0.0
  %172 = vmatpush1.msra.mxu0 0.0
  %173 = vmatprep.subr.mxu0 0.0
  %174 = vmatpush1.msra.mxu0 0.0
  %175 = vmatprep.subr.mxu0 0.0
  %176 = vmatpush1.msra.mxu0 0.0
  %177 = vmatprep.subr.mxu0 0.0
  %178 = vmatpush1.msra.mxu0 0.0
  %179 = vmatprep.subr.mxu0 0.0
  %180 = vmatpush1.msra.mxu0 0.0
  %181 = vmatprep.subr.mxu0 0.0
  %182 = vmatpush1.msra.mxu0 0.0
  %183 = vmatprep.subr.mxu0 0.0
  %184 = vmatpush1.msra.mxu0 0.0
  %185 = vmatprep.subr.mxu0 0.0
  %186 = vmatpush1.msra.mxu0 0.0
  %187 = vmatprep.subr.mxu0 0.0
  %188 = vmatpush1.msra.mxu0 0.0
  %189 = vmatprep.subr.mxu0 0.0
  %190 = vmatpush1.msra.mxu0 0.0
  %191 = vmatprep.subr.mxu0 0.0
  %192 = vmatpush1.msra.mxu0 0.0
  %193 = vmatprep.subr.mxu0 0.0
  %194 = vmatpush1.msra.mxu0 0.0
  %195 = vmatprep.subr.mxu0 0.0
  %196 = vmatpush1.msra.mxu0 0.0
  %197 = vmatprep.subr.mxu0 0.0
  %198 = vmatpush1.msra.mxu0 0.0
  %199 = vmatprep.subr.mxu0 0.0
  %200 = vmatpush1.msra.mxu0 0.0
  %201 = vmatprep.mubr.f32.mxu0 0.0
  %202 = vmatmul.mubr.f32.gmra.mrb[0].mxu0 %v126
  %v203 = vpop.f32.mrb[0].mxu0
  %v204 = vadd.f32 %v124, %v203
  %v205 = vpop.f32.mrb[0].mxu0
  %206 = vmatprep.mubr.f32.mxu0 0.0
  %207 = vmatmul.mubr.f32.gmra.mrb[0].mxu0 %v129
  %v208 = vpop.f32.mrb[0].mxu0
  %v209 = vadd.f32 %v124, %v208
  %v210 = vpop.f32.mrb[0].mxu0
  %211 = vmatprep.mubr.f32.mxu0 0.0
  %212 = vmatmul.mubr.f32.gmra.mrb[0].mxu0 %v132
  %v213 = vpop.f32.mrb[0].mxu0
  %v214 = vadd.f32 %v124, %v213
  %v215 = vpop.f32.mrb[0].mxu0
  %216 = vmatprep.mubr.f32.mxu0 0.0
  %217 = vmatmul.mubr.f32.gmra.mrb[0].mxu0 %v135
  %v218 = vpop.f32.mrb[0].mxu0
  %v219 = vadd.f32 %v124, %v218
  %v220 = vpop.f32.mrb[0].mxu0
  %221 = vdwg.mxu0
  %v222 = vmax.f32 %v204, 0.0
  %v223 = vmax.f32 %v209, 0.0
  %v224 = vmax.f32 %v214, 0.0
  %v225 = vmax.f32 %v219, 0.0
  %v226 = vadd.f32 %v222, 1e-06
  %v227 = vadd.f32 %v223, 1e-06
  %v228 = vadd.f32 %v224, 1e-06
  %v229 = vadd.f32 %v225, 1e-06
  %v230 = vld [vmem:[%s5 + $0x20] sm:$0xff]
  %v231 = vld [vmem:[%s5 + $0x48] sm:$0xff]
  %v232 = vld [vmem:[%s5 + $0x70] sm:$0xff]
  %v233 = vld [vmem:[%s5 + $0x98] sm:$0xff]
  %238 = vrot.lane.b32.xlu0 %v230, 96
  %v239 = vpop.permute.xlu0 %238
  %240 = vrot.lane.b32.xlu0 %v231, 96
  %v241 = vpop.permute.xlu0 %240
  %242 = vrot.lane.b32.xlu0 %v232, 96
  %v243 = vpop.permute.xlu0 %242
  %244 = vrot.lane.b32.xlu0 %v233, 96
  %v245 = vpop.permute.xlu0 %244
  %v251 = vsel %vm40, %v226, 0
  %v254 = vsel %vm40, %v227, 0
  %v257 = vsel %vm40, %v228, 0
  %v260 = vsel %vm40, %v229, 0
  %262 = vmatprep.subr.mxu0 0.0
  %263 = vmatpush1.msra.mxu0 %v239
  %264 = vmatprep.subr.mxu0 0.0
  %265 = vmatpush1.msra.mxu0 %v241
  %266 = vmatprep.subr.mxu0 0.0
  %267 = vmatpush1.msra.mxu0 %v243
  %268 = vmatprep.subr.mxu0 0.0
  %269 = vmatpush1.msra.mxu0 %v245
  %270 = vmatprep.subr.mxu0 0.0
  %271 = vmatpush1.msra.mxu0 0.0
  %272 = vmatprep.subr.mxu0 0.0
  %273 = vmatpush1.msra.mxu0 0.0
  %274 = vmatprep.subr.mxu0 0.0
  %275 = vmatpush1.msra.mxu0 0.0
  %276 = vmatprep.subr.mxu0 0.0
  %277 = vmatpush1.msra.mxu0 0.0
  %278 = vmatprep.subr.mxu0 0.0
  %279 = vmatpush1.msra.mxu0 0.0
  %280 = vmatprep.subr.mxu0 0.0
  %281 = vmatpush1.msra.mxu0 0.0
  %282 = vmatprep.subr.mxu0 0.0
  %283 = vmatpush1.msra.mxu0 0.0
  %284 = vmatprep.subr.mxu0 0.0
  %285 = vmatpush1.msra.mxu0 0.0
  %286 = vmatprep.subr.mxu0 0.0
  %287 = vmatpush1.msra.mxu0 0.0
  %288 = vmatprep.subr.mxu0 0.0
  %289 = vmatpush1.msra.mxu0 0.0
  %290 = vmatprep.subr.mxu0 0.0
  %291 = vmatpush1.msra.mxu0 0.0
  %292 = vmatprep.subr.mxu0 0.0
  %293 = vmatpush1.msra.mxu0 0.0
  %294 = vmatprep.subr.mxu0 0.0
  %295 = vmatpush1.msra.mxu0 0.0
  %296 = vmatprep.subr.mxu0 0.0
  %297 = vmatpush1.msra.mxu0 0.0
  %298 = vmatprep.subr.mxu0 0.0
  %299 = vmatpush1.msra.mxu0 0.0
  %300 = vmatprep.subr.mxu0 0.0
  %301 = vmatpush1.msra.mxu0 0.0
  %302 = vmatprep.subr.mxu0 0.0
  %303 = vmatpush1.msra.mxu0 0.0
  %304 = vmatprep.subr.mxu0 0.0
  %305 = vmatpush1.msra.mxu0 0.0
  %306 = vmatprep.subr.mxu0 0.0
  %307 = vmatpush1.msra.mxu0 0.0
  %308 = vmatprep.subr.mxu0 0.0
  %309 = vmatpush1.msra.mxu0 0.0
  %310 = vmatprep.subr.mxu0 0.0
  %311 = vmatpush1.msra.mxu0 0.0
  %312 = vmatprep.subr.mxu0 0.0
  %313 = vmatpush1.msra.mxu0 0.0
  %314 = vmatprep.subr.mxu0 0.0
  %315 = vmatpush1.msra.mxu0 0.0
  %316 = vmatprep.subr.mxu0 0.0
  %317 = vmatpush1.msra.mxu0 0.0
  %318 = vmatprep.subr.mxu0 0.0
  %319 = vmatpush1.msra.mxu0 0.0
  %320 = vmatprep.subr.mxu0 0.0
  %321 = vmatpush1.msra.mxu0 0.0
  %322 = vmatprep.subr.mxu0 0.0
  %323 = vmatpush1.msra.mxu0 0.0
  %324 = vmatprep.subr.mxu0 0.0
  %325 = vmatpush1.msra.mxu0 0.0
  %326 = vmatprep.mubr.f32.mxu0 0.0
  %327 = vmatmul.mubr.f32.gmra.mrb[0].mxu0 %v251
  %v328 = vpop.f32.mrb[0].mxu0
  %v329 = vadd.f32 0.0, %v328
  %v330 = vpop.f32.mrb[0].mxu0
  %331 = vmatprep.mubr.f32.mxu0 0.0
  %332 = vmatmul.mubr.f32.gmra.mrb[0].mxu0 %v254
  %v333 = vpop.f32.mrb[0].mxu0
  %v334 = vadd.f32 0.0, %v333
  %v335 = vpop.f32.mrb[0].mxu0
  %336 = vmatprep.mubr.f32.mxu0 0.0
  %337 = vmatmul.mubr.f32.gmra.mrb[0].mxu0 %v257
  %v338 = vpop.f32.mrb[0].mxu0
  %v339 = vadd.f32 0.0, %v338
  %v340 = vpop.f32.mrb[0].mxu0
  %341 = vmatprep.mubr.f32.mxu0 0.0
  %342 = vmatmul.mubr.f32.gmra.mrb[0].mxu0 %v260
  %v343 = vpop.f32.mrb[0].mxu0
  %v344 = vadd.f32 0.0, %v343
  %v345 = vpop.f32.mrb[0].mxu0
  %346 = vdwg.mxu0
  %v347 = vld [vmem:[%s2] sm:$0x3]
  %352 = vrot.lane.b32.xlu0 %v204, 96
  %v353 = vpop.permute.xlu0 %352
  %354 = vrot.lane.b32.xlu0 %v209, 96
  %v355 = vpop.permute.xlu0 %354
  %356 = vrot.lane.b32.xlu0 %v214, 96
  %v357 = vpop.permute.xlu0 %356
  %358 = vrot.lane.b32.xlu0 %v219, 96
  %v359 = vpop.permute.xlu0 %358
  %v364 = vmul.f32 %v226, %v353
  %v365 = vmul.f32 %v227, %v355
  %v366 = vmul.f32 %v228, %v357
  %v367 = vmul.f32 %v229, %v359
  %372 = vrot.lane.b32.xlu0 %v329, 32
  %v373 = vpop.permute.xlu0 %372
  %374 = vrot.lane.b32.xlu0 %v334, 32
  %v375 = vpop.permute.xlu0 %374
  %376 = vrot.lane.b32.xlu0 %v339, 32
  %v377 = vpop.permute.xlu0 %376
  %378 = vrot.lane.b32.xlu0 %v344, 32
  %v379 = vpop.permute.xlu0 %378
  %v384 = vsel %vm40, %v364, %v373
  %v385 = vsel %vm40, %v365, %v375
  %v386 = vsel %vm40, %v366, %v377
  %v387 = vsel %vm40, %v367, %v379
  %v389 = vsel %vm40, %v347, 0
  %391 = vmatprep.subr.mxu0 0.0
  %392 = vmatpush1.msra.mxu0 %v384
  %393 = vmatprep.subr.mxu0 0.0
  %394 = vmatpush1.msra.mxu0 %v385
  %395 = vmatprep.subr.mxu0 0.0
  %396 = vmatpush1.msra.mxu0 %v386
  %397 = vmatprep.subr.mxu0 0.0
  %398 = vmatpush1.msra.mxu0 %v387
  %399 = vmatprep.subr.mxu0 0.0
  %400 = vmatpush1.msra.mxu0 0.0
  %401 = vmatprep.subr.mxu0 0.0
  %402 = vmatpush1.msra.mxu0 0.0
  %403 = vmatprep.subr.mxu0 0.0
  %404 = vmatpush1.msra.mxu0 0.0
  %405 = vmatprep.subr.mxu0 0.0
  %406 = vmatpush1.msra.mxu0 0.0
  %407 = vmatprep.subr.mxu0 0.0
  %408 = vmatpush1.msra.mxu0 0.0
  %409 = vmatprep.subr.mxu0 0.0
  %410 = vmatpush1.msra.mxu0 0.0
  %411 = vmatprep.subr.mxu0 0.0
  %412 = vmatpush1.msra.mxu0 0.0
  %413 = vmatprep.subr.mxu0 0.0
  %414 = vmatpush1.msra.mxu0 0.0
  %415 = vmatprep.subr.mxu0 0.0
  %416 = vmatpush1.msra.mxu0 0.0
  %417 = vmatprep.subr.mxu0 0.0
  %418 = vmatpush1.msra.mxu0 0.0
  %419 = vmatprep.subr.mxu0 0.0
  %420 = vmatpush1.msra.mxu0 0.0
  %421 = vmatprep.subr.mxu0 0.0
  %422 = vmatpush1.msra.mxu0 0.0
  %423 = vmatprep.subr.mxu0 0.0
  %424 = vmatpush1.msra.mxu0 0.0
  %425 = vmatprep.subr.mxu0 0.0
  %426 = vmatpush1.msra.mxu0 0.0
  %427 = vmatprep.subr.mxu0 0.0
  %428 = vmatpush1.msra.mxu0 0.0
  %429 = vmatprep.subr.mxu0 0.0
  %430 = vmatpush1.msra.mxu0 0.0
  %431 = vmatprep.subr.mxu0 0.0
  %432 = vmatpush1.msra.mxu0 0.0
  %433 = vmatprep.subr.mxu0 0.0
  %434 = vmatpush1.msra.mxu0 0.0
  %435 = vmatprep.subr.mxu0 0.0
  %436 = vmatpush1.msra.mxu0 0.0
  %437 = vmatprep.subr.mxu0 0.0
  %438 = vmatpush1.msra.mxu0 0.0
  %439 = vmatprep.subr.mxu0 0.0
  %440 = vmatpush1.msra.mxu0 0.0
  %441 = vmatprep.subr.mxu0 0.0
  %442 = vmatpush1.msra.mxu0 0.0
  %443 = vmatprep.subr.mxu0 0.0
  %444 = vmatpush1.msra.mxu0 0.0
  %445 = vmatprep.subr.mxu0 0.0
  %446 = vmatpush1.msra.mxu0 0.0
  %447 = vmatprep.subr.mxu0 0.0
  %448 = vmatpush1.msra.mxu0 0.0
  %449 = vmatprep.subr.mxu0 0.0
  %450 = vmatpush1.msra.mxu0 0.0
  %451 = vmatprep.subr.mxu0 0.0
  %452 = vmatpush1.msra.mxu0 0.0
  %453 = vmatprep.subr.mxu0 0.0
  %454 = vmatpush1.msra.mxu0 0.0
  %455 = vmatprep.mubr.f32.mxu0 0.0
  %456 = vmatmul.mubr.f32.gmra.mrb[0].mxu0 %v389
  %v457 = vpop.f32.mrb[0].mxu0
  %v458 = vadd.f32 0.0, %v457
  %v459 = vpop.f32.mrb[0].mxu0
  %460 = vdwg.mxu0
  %v461 = vadd.f32 %v458, 1e-06
  %v462 = vrcp.pop %v461
  %v463 = vmul.f32 %v115, %v458
  %465 = vrot.lane.b32.xlu0 %v462, 96
  %v466 = vpop.permute.xlu0 %465
  %v468 = vmul.f32 %v463, %v466
  %v469 = vld [vmem:[%s5 + $0x18] sm:$0xff]
  %v470 = vld [vmem:[%s5 + $0x40] sm:$0xff]
  %v471 = vld [vmem:[%s5 + $0x68] sm:$0xff]
  %v472 = vld [vmem:[%s5 + $0x90] sm:$0xff]
  %v473 = vld [vmem:[%s8 + $0x3] ss:$0 sm:$0xff]
  %478 = vrot.lane.b32.xlu0 %v469, 64
  %v479 = vpop.permute.xlu0 %478
  %480 = vrot.lane.b32.xlu0 %v470, 64
  %v481 = vpop.permute.xlu0 %480
  %482 = vrot.lane.b32.xlu0 %v471, 64
  %v483 = vpop.permute.xlu0 %482
  %484 = vrot.lane.b32.xlu0 %v472, 64
  %v485 = vpop.permute.xlu0 %484
  %v491 = vsel %vm40, %v468, 0
  %493 = vmatprep.subr.mxu0 0.0
  %494 = vmatpush1.msra.mxu0 %v479
  %495 = vmatprep.subr.mxu0 0.0
  %496 = vmatpush1.msra.mxu0 %v481
  %497 = vmatprep.subr.mxu0 0.0
  %498 = vmatpush1.msra.mxu0 %v483
  %499 = vmatprep.subr.mxu0 0.0
  %500 = vmatpush1.msra.mxu0 %v485
  %501 = vmatprep.subr.mxu0 0.0
  %502 = vmatpush1.msra.mxu0 0.0
  %503 = vmatprep.subr.mxu0 0.0
  %504 = vmatpush1.msra.mxu0 0.0
  %505 = vmatprep.subr.mxu0 0.0
  %506 = vmatpush1.msra.mxu0 0.0
  %507 = vmatprep.subr.mxu0 0.0
  %508 = vmatpush1.msra.mxu0 0.0
  %509 = vmatprep.subr.mxu0 0.0
  %510 = vmatpush1.msra.mxu0 0.0
  %511 = vmatprep.subr.mxu0 0.0
  %512 = vmatpush1.msra.mxu0 0.0
  %513 = vmatprep.subr.mxu0 0.0
  %514 = vmatpush1.msra.mxu0 0.0
  %515 = vmatprep.subr.mxu0 0.0
  %516 = vmatpush1.msra.mxu0 0.0
  %517 = vmatprep.subr.mxu0 0.0
  %518 = vmatpush1.msra.mxu0 0.0
  %519 = vmatprep.subr.mxu0 0.0
  %520 = vmatpush1.msra.mxu0 0.0
  %521 = vmatprep.subr.mxu0 0.0
  %522 = vmatpush1.msra.mxu0 0.0
  %523 = vmatprep.subr.mxu0 0.0
  %524 = vmatpush1.msra.mxu0 0.0
  %525 = vmatprep.subr.mxu0 0.0
  %526 = vmatpush1.msra.mxu0 0.0
  %527 = vmatprep.subr.mxu0 0.0
  %528 = vmatpush1.msra.mxu0 0.0
  %529 = vmatprep.subr.mxu0 0.0
  %530 = vmatpush1.msra.mxu0 0.0
  %531 = vmatprep.subr.mxu0 0.0
  %532 = vmatpush1.msra.mxu0 0.0
  %533 = vmatprep.subr.mxu0 0.0
  %534 = vmatpush1.msra.mxu0 0.0
  %535 = vmatprep.subr.mxu0 0.0
  %536 = vmatpush1.msra.mxu0 0.0
  %537 = vmatprep.subr.mxu0 0.0
  %538 = vmatpush1.msra.mxu0 0.0
  %539 = vmatprep.subr.mxu0 0.0
  %540 = vmatpush1.msra.mxu0 0.0
  %541 = vmatprep.subr.mxu0 0.0
  %542 = vmatpush1.msra.mxu0 0.0
  %543 = vmatprep.subr.mxu0 0.0
  %544 = vmatpush1.msra.mxu0 0.0
  %545 = vmatprep.subr.mxu0 0.0
  %546 = vmatpush1.msra.mxu0 0.0
  %547 = vmatprep.subr.mxu0 0.0
  %548 = vmatpush1.msra.mxu0 0.0
  %549 = vmatprep.subr.mxu0 0.0
  %550 = vmatpush1.msra.mxu0 0.0
  %551 = vmatprep.subr.mxu0 0.0
  %552 = vmatpush1.msra.mxu0 0.0
  %553 = vmatprep.subr.mxu0 0.0
  %554 = vmatpush1.msra.mxu0 0.0
  %555 = vmatprep.subr.mxu0 0.0
  %556 = vmatpush1.msra.mxu0 0.0
  %557 = vmatprep.mubr.f32.mxu0 0.0
  %558 = vmatmul.mubr.f32.gmra.mrb[0].mxu0 %v491
  %v559 = vpop.f32.mrb[0].mxu0
  %v560 = vadd.f32 %v473, %v559
  %v561 = vpop.f32.mrb[0].mxu0
  %562 = vdwg.mxu0
  %v563 = vxor.u32 %v560, 2147483648
  %v564 = vmul.f32 %v563, 1.442695
  %v565 = vpow.pop %v564
  %v566 = vadd.f32 %v565, 1.0
  %v567 = vrcp.pop %v566
  %v568 = vmul.f32 1.0, %v567
  %v569 = vmul.f32 %v560, %v568
  %v570 = vadd.f32 %v569, %v32
  %v571 = vld [vmem:[%s8 + $0x11] ss:$0 sm:$0xff]
  %v572 = vld [vmem:[%s8 + $0x12] ss:$0 sm:$0xff]
  %vm573 = vcmask 254976
  %v574 = vsel %vm573, %v570, 0.0
  %575 = vadd.xlane.f32.xlu0 %v574
  %v576 = vpop.xlane.xlu0 %575
  %v577 = vrcp.pop 32.0
  %v578 = vmul.f32 %v576, %v577
  %v579 = vsub.f32 %v570, %v578
  %v580 = vmul.f32 %v579, %v579
  %v581 = vsel %vm573, %v580, 0.0
  %582 = vadd.xlane.f32.xlu0 %v581
  %v583 = vpop.xlane.xlu0 %582
  %v584 = vmul.f32 %v583, %v577
  %v585 = vadd.f32 %v584, 1e-05
  %v586 = vrsqrt.pop %v585
  %v587 = vmul.f32 %v579, %v586
  %v588 = vmul.f32 %v587, %v571
  %v589 = vadd.f32 %v588, %v572
  %v590 = vtanh.pop %v111
  %v591 = vld [vmem:[%s7] sm:$0xff]
  %v592 = vld [vmem:[%s8 + $0x7] ss:$0 sm:$0xff]
  %594 = vrot.lane.b32.xlu0 %v590, 32
  %v595 = vpop.permute.xlu0 %594
  %vm596 = vcmask 64512
  %v597 = vsel %vm596, %v595, 0
  %599 = vmatprep.subr.mxu0 0.0
  %600 = vmatpush1.msra.mxu0 %v591
  %601 = vmatprep.subr.mxu0 0.0
  %602 = vmatpush1.msra.mxu0 0.0
  %603 = vmatprep.subr.mxu0 0.0
  %604 = vmatpush1.msra.mxu0 0.0
  %605 = vmatprep.subr.mxu0 0.0
  %606 = vmatpush1.msra.mxu0 0.0
  %607 = vmatprep.subr.mxu0 0.0
  %608 = vmatpush1.msra.mxu0 0.0
  %609 = vmatprep.subr.mxu0 0.0
  %610 = vmatpush1.msra.mxu0 0.0
  %611 = vmatprep.subr.mxu0 0.0
  %612 = vmatpush1.msra.mxu0 0.0
  %613 = vmatprep.subr.mxu0 0.0
  %614 = vmatpush1.msra.mxu0 0.0
  %615 = vmatprep.subr.mxu0 0.0
  %616 = vmatpush1.msra.mxu0 0.0
  %617 = vmatprep.subr.mxu0 0.0
  %618 = vmatpush1.msra.mxu0 0.0
  %619 = vmatprep.subr.mxu0 0.0
  %620 = vmatpush1.msra.mxu0 0.0
  %621 = vmatprep.subr.mxu0 0.0
  %622 = vmatpush1.msra.mxu0 0.0
  %623 = vmatprep.subr.mxu0 0.0
  %624 = vmatpush1.msra.mxu0 0.0
  %625 = vmatprep.subr.mxu0 0.0
  %626 = vmatpush1.msra.mxu0 0.0
  %627 = vmatprep.subr.mxu0 0.0
  %628 = vmatpush1.msra.mxu0 0.0
  %629 = vmatprep.subr.mxu0 0.0
  %630 = vmatpush1.msra.mxu0 0.0
  %631 = vmatprep.subr.mxu0 0.0
  %632 = vmatpush1.msra.mxu0 0.0
  %633 = vmatprep.subr.mxu0 0.0
  %634 = vmatpush1.msra.mxu0 0.0
  %635 = vmatprep.subr.mxu0 0.0
  %636 = vmatpush1.msra.mxu0 0.0
  %637 = vmatprep.subr.mxu0 0.0
  %638 = vmatpush1.msra.mxu0 0.0
  %639 = vmatprep.subr.mxu0 0.0
  %640 = vmatpush1.msra.mxu0 0.0
  %641 = vmatprep.subr.mxu0 0.0
  %642 = vmatpush1.msra.mxu0 0.0
  %643 = vmatprep.subr.mxu0 0.0
  %644 = vmatpush1.msra.mxu0 0.0
  %645 = vmatprep.subr.mxu0 0.0
  %646 = vmatpush1.msra.mxu0 0.0
  %647 = vmatprep.subr.mxu0 0.0
  %648 = vmatpush1.msra.mxu0 0.0
  %649 = vmatprep.subr.mxu0 0.0
  %650 = vmatpush1.msra.mxu0 0.0
  %651 = vmatprep.subr.mxu0 0.0
  %652 = vmatpush1.msra.mxu0 0.0
  %653 = vmatprep.subr.mxu0 0.0
  %654 = vmatpush1.msra.mxu0 0.0
  %655 = vmatprep.subr.mxu0 0.0
  %656 = vmatpush1.msra.mxu0 0.0
  %657 = vmatprep.subr.mxu0 0.0
  %658 = vmatpush1.msra.mxu0 0.0
  %659 = vmatprep.subr.mxu0 0.0
  %660 = vmatpush1.msra.mxu0 0.0
  %661 = vmatprep.subr.mxu0 0.0
  %662 = vmatpush1.msra.mxu0 0.0
  %663 = vmatprep.mubr.f32.mxu0 0.0
  %664 = vmatmul.mubr.f32.gmra.mrb[0].mxu0 %v597
  %v665 = vpop.f32.mrb[0].mxu0
  %v666 = vadd.f32 %v592, %v665
  %v667 = vpop.f32.mrb[0].mxu0
  %668 = vdwg.mxu0
  %vm669 = vcmask 58368
  %v670 = vsel %vm669, %v666, -inf
  %671 = vmax.xlane.f32.xlu0 %v670
  %v672 = vpop.xlane.xlu0 %671
  %v673 = vsub.f32 %v666, %v672
  %v674 = vmul.f32 %v673, 1.442695
  %v675 = vpow.pop %v674
  %v676 = vsel %vm669, %v675, 0.0
  %677 = vadd.xlane.f32.xlu0 %v676
  %v678 = vpop.xlane.xlu0 %677
  %v679 = vrcp.pop %v678
  %v680 = vmul.f32 %v675, %v679
  %v681 = vxor.u32 %v111, 2147483648
  %v682 = vmul.f32 %v681, 1.442695
  %v683 = vpow.pop %v682
  %v684 = vadd.f32 %v683, 1.0
  %v685 = vrcp.pop %v684
  %v686 = vmul.f32 1.0, %v685
  %v687 = vmul.f32 %v686, 0.3
  %v688 = vsub.f32 1.0, %v687
  %690 = vset.pattern.permute.xlu0 104
  %691 = vperm.xlu0 %690, %v688
  %v692 = vpop.permute.xlu0 %691
  %v694 = vmul.f32 %v692, %v680
  %696 = vset.pattern.permute.xlu0 104
  %697 = vperm.xlu0 %696, %v687
  %v698 = vpop.permute.xlu0 %697
  %v700 = vmul.f32 %v698, %v34
  %v701 = vadd.f32 %v694, %v700
  %v702 = vmul.f32 %v34, 0.9
  %v703 = vmul.f32 %v701, 0.1
  %v704 = vadd.f32 %v702, %v703
  %v705 = vld [vmem:[%s8 + $0x10] ss:$0 sm:$0xff]
  %707 = vrot.lane.b32.xlu0 %v591, 120
  %v708 = vpop.permute.xlu0 %707
  %v711 = vsel %vm596, %v704, 0
  %713 = vmatprep.subr.mxu0 0.0
  %714 = vmatpush1.msra.mxu0 %v708
  %715 = vmatprep.subr.mxu0 0.0
  %716 = vmatpush1.msra.mxu0 0.0
  %717 = vmatprep.subr.mxu0 0.0
  %718 = vmatpush1.msra.mxu0 0.0
  %719 = vmatprep.subr.mxu0 0.0
  %720 = vmatpush1.msra.mxu0 0.0
  %721 = vmatprep.subr.mxu0 0.0
  %722 = vmatpush1.msra.mxu0 0.0
  %723 = vmatprep.subr.mxu0 0.0
  %724 = vmatpush1.msra.mxu0 0.0
  %725 = vmatprep.subr.mxu0 0.0
  %726 = vmatpush1.msra.mxu0 0.0
  %727 = vmatprep.subr.mxu0 0.0
  %728 = vmatpush1.msra.mxu0 0.0
  %729 = vmatprep.subr.mxu0 0.0
  %730 = vmatpush1.msra.mxu0 0.0
  %731 = vmatprep.subr.mxu0 0.0
  %732 = vmatpush1.msra.mxu0 0.0
  %733 = vmatprep.subr.mxu0 0.0
  %734 = vmatpush1.msra.mxu0 0.0
  %735 = vmatprep.subr.mxu0 0.0
  %736 = vmatpush1.msra.mxu0 0.0
  %737 = vmatprep.subr.mxu0 0.0
  %738 = vmatpush1.msra.mxu0 0.0
  %739 = vmatprep.subr.mxu0 0.0
  %740 = vmatpush1.msra.mxu0 0.0
  %741 = vmatprep.subr.mxu0 0.0
  %742 = vmatpush1.msra.mxu0 0.0
  %743 = vmatprep.subr.mxu0 0.0
  %744 = vmatpush1.msra.mxu0 0.0
  %745 = vmatprep.subr.mxu0 0.0
  %746 = vmatpush1.msra.mxu0 0.0
  %747 = vmatprep.subr.mxu0 0.0
  %748 = vmatpush1.msra.mxu0 0.0
  %749 = vmatprep.subr.mxu0 0.0
  %750 = vmatpush1.msra.mxu0 0.0
  %751 = vmatprep.subr.mxu0 0.0
  %752 = vmatpush1.msra.mxu0 0.0
  %753 = vmatprep.subr.mxu0 0.0
  %754 = vmatpush1.msra.mxu0 0.0
  %755 = vmatprep.subr.mxu0 0.0
  %756 = vmatpush1.msra.mxu0 0.0
  %757 = vmatprep.subr.mxu0 0.0
  %758 = vmatpush1.msra.mxu0 0.0
  %759 = vmatprep.subr.mxu0 0.0
  %760 = vmatpush1.msra.mxu0 0.0
  %761 = vmatprep.subr.mxu0 0.0
  %762 = vmatpush1.msra.mxu0 0.0
  %763 = vmatprep.subr.mxu0 0.0
  %764 = vmatpush1.msra.mxu0 0.0
  %765 = vmatprep.subr.mxu0 0.0
  %766 = vmatpush1.msra.mxu0 0.0
  %767 = vmatprep.subr.mxu0 0.0
  %768 = vmatpush1.msra.mxu0 0.0
  %769 = vmatprep.subr.mxu0 0.0
  %770 = vmatpush1.msra.mxu0 0.0
  %771 = vmatprep.subr.mxu0 0.0
  %772 = vmatpush1.msra.mxu0 0.0
  %773 = vmatprep.subr.mxu0 0.0
  %774 = vmatpush1.msra.mxu0 0.0
  %775 = vmatprep.subr.mxu0 0.0
  %776 = vmatpush1.msra.mxu0 0.0
  %777 = vmatprep.mubr.f32.mxu0 0.0
  %778 = vmatmul.mubr.f32.gmra.mrb[0].mxu0 %v711
  %v779 = vpop.f32.mrb[0].mxu0
  %v780 = vadd.f32 %v705, %v779
  %v781 = vpop.f32.mrb[0].mxu0
  %782 = vdwg.mxu0
  %784 = vrot.lane.b32.xlu0 %v780, 32
  %v785 = vpop.permute.xlu0 %784
  %v787 = vsel %vm40, %v33, %v785
  %v788 = vld [vmem:[%s6] sm:$0xff]
  %v789 = vld [vmem:[%s6 + $0x8] sm:$0xff]
  %v790 = vld [vmem:[%s6 + $0x10] sm:$0xff]
  %v791 = vld [vmem:[%s6 + $0x18] sm:$0xff]
  %v792 = vld [vmem:[%s6 + $0x20] sm:$0xff]
  %v793 = vld [vmem:[%s6 + $0x28] sm:$0xff]
  %v794 = vld [vmem:[%s6 + $0x30] sm:$0xff]
  %v795 = vld [vmem:[%s6 + $0x38] sm:$0xff]
  %v796 = vld [vmem:[%s8 + $0x4] ss:$0 sm:$0xff]
  %vm797 = vcmask 523264
  %v799 = vsel %vm797, %v787, 0
  %801 = vmatprep.subr.mxu0 0.0
  %802 = vmatpush1.msra.mxu0 %v788
  %803 = vmatprep.subr.mxu0 0.0
  %804 = vmatpush1.msra.mxu0 %v789
  %805 = vmatprep.subr.mxu0 0.0
  %806 = vmatpush1.msra.mxu0 %v790
  %807 = vmatprep.subr.mxu0 0.0
  %808 = vmatpush1.msra.mxu0 %v791
  %809 = vmatprep.subr.mxu0 0.0
  %810 = vmatpush1.msra.mxu0 %v792
  %811 = vmatprep.subr.mxu0 0.0
  %812 = vmatpush1.msra.mxu0 %v793
  %813 = vmatprep.subr.mxu0 0.0
  %814 = vmatpush1.msra.mxu0 %v794
  %815 = vmatprep.subr.mxu0 0.0
  %816 = vmatpush1.msra.mxu0 %v795
  %817 = vmatprep.subr.mxu0 0.0
  %818 = vmatpush1.msra.mxu0 0.0
  %819 = vmatprep.subr.mxu0 0.0
  %820 = vmatpush1.msra.mxu0 0.0
  %821 = vmatprep.subr.mxu0 0.0
  %822 = vmatpush1.msra.mxu0 0.0
  %823 = vmatprep.subr.mxu0 0.0
  %824 = vmatpush1.msra.mxu0 0.0
  %825 = vmatprep.subr.mxu0 0.0
  %826 = vmatpush1.msra.mxu0 0.0
  %827 = vmatprep.subr.mxu0 0.0
  %828 = vmatpush1.msra.mxu0 0.0
  %829 = vmatprep.subr.mxu0 0.0
  %830 = vmatpush1.msra.mxu0 0.0
  %831 = vmatprep.subr.mxu0 0.0
  %832 = vmatpush1.msra.mxu0 0.0
  %833 = vmatprep.subr.mxu0 0.0
  %834 = vmatpush1.msra.mxu0 0.0
  %835 = vmatprep.subr.mxu0 0.0
  %836 = vmatpush1.msra.mxu0 0.0
  %837 = vmatprep.subr.mxu0 0.0
  %838 = vmatpush1.msra.mxu0 0.0
  %839 = vmatprep.subr.mxu0 0.0
  %840 = vmatpush1.msra.mxu0 0.0
  %841 = vmatprep.subr.mxu0 0.0
  %842 = vmatpush1.msra.mxu0 0.0
  %843 = vmatprep.subr.mxu0 0.0
  %844 = vmatpush1.msra.mxu0 0.0
  %845 = vmatprep.subr.mxu0 0.0
  %846 = vmatpush1.msra.mxu0 0.0
  %847 = vmatprep.subr.mxu0 0.0
  %848 = vmatpush1.msra.mxu0 0.0
  %849 = vmatprep.subr.mxu0 0.0
  %850 = vmatpush1.msra.mxu0 0.0
  %851 = vmatprep.subr.mxu0 0.0
  %852 = vmatpush1.msra.mxu0 0.0
  %853 = vmatprep.subr.mxu0 0.0
  %854 = vmatpush1.msra.mxu0 0.0
  %855 = vmatprep.subr.mxu0 0.0
  %856 = vmatpush1.msra.mxu0 0.0
  %857 = vmatprep.subr.mxu0 0.0
  %858 = vmatpush1.msra.mxu0 0.0
  %859 = vmatprep.subr.mxu0 0.0
  %860 = vmatpush1.msra.mxu0 0.0
  %861 = vmatprep.subr.mxu0 0.0
  %862 = vmatpush1.msra.mxu0 0.0
  %863 = vmatprep.subr.mxu0 0.0
  %864 = vmatpush1.msra.mxu0 0.0
  %865 = vmatprep.mubr.f32.mxu0 0.0
  %866 = vmatmul.mubr.f32.gmra.mrb[0].mxu0 %v799
  %v867 = vpop.f32.mrb[0].mxu0
  %v868 = vadd.f32 %v796, %v867
  %v869 = vpop.f32.mrb[0].mxu0
  %870 = vdwg.mxu0
  %v871 = vxor.u32 %v868, 2147483648
  %v872 = vmul.f32 %v871, 1.442695
  %v873 = vpow.pop %v872
  %v874 = vadd.f32 %v873, 1.0
  %v875 = vrcp.pop %v874
  %v876 = vmul.f32 1.0, %v875
  %v877 = vtanh.pop %v780
  %v878 = vmul.f32 %v877, 0.2
  %v879 = vadd.f32 %v878, 1.0
  %v880 = vmul.f32 %v33, %v879
  %v881 = vmul.f32 %v880, %v876
  %v882 = vmul.f32 %v32, %v32
  %v883 = vsel %vm573, %v882, 0.0
  %884 = vadd.xlane.f32.xlu0 %v883
  %v885 = vpop.xlane.xlu0 %884
  %v886 = vrsqrt.pop %v885
  %v887 = vmul.f32 %v885, %v886
  %vm888 = vcmp.eq.f32.partialorder %v885, inf
  %v889 = vsel %vm888, %v885, %v887
  %vm890 = vcmp.eq.f32.partialorder %v885, 0.0
  %v891 = vand.u32 %v885, 2147483648
  %v892 = vsel %vm890, %v891, %v889
  %vm893 = vcmp.gt.f32.partialorder %v892, %v686
  %v894 = vsel %vm893, 1, 0
  %v895 = vcvt.s32.f32 %v894
  %896 = vrot.lane.b32.xlu0 %v469, 32
  %v897 = vpop.permute.xlu0 %896
  %898 = vrot.lane.b32.xlu0 %v470, 32
  %v899 = vpop.permute.xlu0 %898
  %900 = vrot.lane.b32.xlu0 %v471, 32
  %v901 = vpop.permute.xlu0 %900
  %902 = vrot.lane.b32.xlu0 %v472, 32
  %v903 = vpop.permute.xlu0 %902
  %v909 = vsel %vm40, %v881, 0
  %911 = vmatprep.subr.mxu0 0.0
  %912 = vmatpush1.msra.mxu0 %v897
  %913 = vmatprep.subr.mxu0 0.0
  %914 = vmatpush1.msra.mxu0 %v899
  %915 = vmatprep.subr.mxu0 0.0
  %916 = vmatpush1.msra.mxu0 %v901
  %917 = vmatprep.subr.mxu0 0.0
  %918 = vmatpush1.msra.mxu0 %v903
  %919 = vmatprep.subr.mxu0 0.0
  %920 = vmatpush1.msra.mxu0 0.0
  %921 = vmatprep.subr.mxu0 0.0
  %922 = vmatpush1.msra.mxu0 0.0
  %923 = vmatprep.subr.mxu0 0.0
  %924 = vmatpush1.msra.mxu0 0.0
  %925 = vmatprep.subr.mxu0 0.0
  %926 = vmatpush1.msra.mxu0 0.0
  %927 = vmatprep.subr.mxu0 0.0
  %928 = vmatpush1.msra.mxu0 0.0
  %929 = vmatprep.subr.mxu0 0.0
  %930 = vmatpush1.msra.mxu0 0.0
  %931 = vmatprep.subr.mxu0 0.0
  %932 = vmatpush1.msra.mxu0 0.0
  %933 = vmatprep.subr.mxu0 0.0
  %934 = vmatpush1.msra.mxu0 0.0
  %935 = vmatprep.subr.mxu0 0.0
  %936 = vmatpush1.msra.mxu0 0.0
  %937 = vmatprep.subr.mxu0 0.0
  %938 = vmatpush1.msra.mxu0 0.0
  %939 = vmatprep.subr.mxu0 0.0
  %940 = vmatpush1.msra.mxu0 0.0
  %941 = vmatprep.subr.mxu0 0.0
  %942 = vmatpush1.msra.mxu0 0.0
  %943 = vmatprep.subr.mxu0 0.0
  %944 = vmatpush1.msra.mxu0 0.0
  %945 = vmatprep.subr.mxu0 0.0
  %946 = vmatpush1.msra.mxu0 0.0
  %947 = vmatprep.subr.mxu0 0.0
  %948 = vmatpush1.msra.mxu0 0.0
  %949 = vmatprep.subr.mxu0 0.0
  %950 = vmatpush1.msra.mxu0 0.0
  %951 = vmatprep.subr.mxu0 0.0
  %952 = vmatpush1.msra.mxu0 0.0
  %953 = vmatprep.subr.mxu0 0.0
  %954 = vmatpush1.msra.mxu0 0.0
  %955 = vmatprep.subr.mxu0 0.0
  %956 = vmatpush1.msra.mxu0 0.0
  %957 = vmatprep.subr.mxu0 0.0
  %958 = vmatpush1.msra.mxu0 0.0
  %959 = vmatprep.subr.mxu0 0.0
  %960 = vmatpush1.msra.mxu0 0.0
  %961 = vmatprep.subr.mxu0 0.0
  %962 = vmatpush1.msra.mxu0 0.0
  %963 = vmatprep.subr.mxu0 0.0
  %964 = vmatpush1.msra.mxu0 0.0
  %965 = vmatprep.subr.mxu0 0.0
  %966 = vmatpush1.msra.mxu0 0.0
  %967 = vmatprep.subr.mxu0 0.0
  %968 = vmatpush1.msra.mxu0 0.0
  %969 = vmatprep.subr.mxu0 0.0
  %970 = vmatpush1.msra.mxu0 0.0
  %971 = vmatprep.subr.mxu0 0.0
  %972 = vmatpush1.msra.mxu0 0.0
  %973 = vmatprep.subr.mxu0 0.0
  %974 = vmatpush1.msra.mxu0 0.0
  %975 = vmatprep.mubr.f32.mxu0 0.0
  %976 = vmatmul.mubr.f32.gmra.mrb[0].mxu0 %v909
  %v977 = vpop.f32.mrb[0].mxu0
  %v978 = vadd.f32 0.0, %v977
  %v979 = vpop.f32.mrb[0].mxu0
  %980 = vdwg.mxu0
  %982 = vrot.lane.b32.xlu0 %v978, 32
  %v983 = vpop.permute.xlu0 %982
  %v985 = vadd.f32 %v111, %v983
  %v986 = vxor.u32 %v985, 2147483648
  %v987 = vmul.f32 %v986, 1.442695
  %v988 = vpow.pop %v987
  %v989 = vadd.f32 %v988, 1.0
  %v990 = vrcp.pop %v989
  %v991 = vmul.f32 1.0, %v990
  %v992 = vmul.f32 %v881, 0.9
  %994 = vset.pattern.permute.xlu0 105
  %995 = vperm.xlu0 %994, %v895
  %v996 = vpop.permute.xlu0 %995
  %v998 = vmul.f32 %v111, %v996
  %1000 = vrot.lane.b32.xlu0 %v998, 96
  %v1001 = vpop.permute.xlu0 %1000
  %v1003 = vmul.f32 %v991, %v1001
  %v1004 = vmul.f32 %v1003, 0.1
  %1006 = vrot.lane.b32.xlu0 %v1004, 96
  %v1007 = vpop.permute.xlu0 %1006
  %v1009 = vadd.f32 %v992, %v1007
  %v1011 = vsel %vm40, %v1009, 0
  %1013 = vmatprep.subr.mxu0 0.0
  %1014 = vmatpush1.msra.mxu0 %v230
  %1015 = vmatprep.subr.mxu0 0.0
  %1016 = vmatpush1.msra.mxu0 %v231
  %1017 = vmatprep.subr.mxu0 0.0
  %1018 = vmatpush1.msra.mxu0 %v232
  %1019 = vmatprep.subr.mxu0 0.0
  %1020 = vmatpush1.msra.mxu0 %v233
  %1021 = vmatprep.subr.mxu0 0.0
  %1022 = vmatpush1.msra.mxu0 0.0
  %1023 = vmatprep.subr.mxu0 0.0
  %1024 = vmatpush1.msra.mxu0 0.0
  %1025 = vmatprep.subr.mxu0 0.0
  %1026 = vmatpush1.msra.mxu0 0.0
  %1027 = vmatprep.subr.mxu0 0.0
  %1028 = vmatpush1.msra.mxu0 0.0
  %1029 = vmatprep.subr.mxu0 0.0
  %1030 = vmatpush1.msra.mxu0 0.0
  %1031 = vmatprep.subr.mxu0 0.0
  %1032 = vmatpush1.msra.mxu0 0.0
  %1033 = vmatprep.subr.mxu0 0.0
  %1034 = vmatpush1.msra.mxu0 0.0
  %1035 = vmatprep.subr.mxu0 0.0
  %1036 = vmatpush1.msra.mxu0 0.0
  %1037 = vmatprep.subr.mxu0 0.0
  %1038 = vmatpush1.msra.mxu0 0.0
  %1039 = vmatprep.subr.mxu0 0.0
  %1040 = vmatpush1.msra.mxu0 0.0
  %1041 = vmatprep.subr.mxu0 0.0
  %1042 = vmatpush1.msra.mxu0 0.0
  %1043 = vmatprep.subr.mxu0 0.0
  %1044 = vmatpush1.msra.mxu0 0.0
  %1045 = vmatprep.subr.mxu0 0.0
  %1046 = vmatpush1.msra.mxu0 0.0
  %1047 = vmatprep.subr.mxu0 0.0
  %1048 = vmatpush1.msra.mxu0 0.0
  %1049 = vmatprep.subr.mxu0 0.0
  %1050 = vmatpush1.msra.mxu0 0.0
  %1051 = vmatprep.subr.mxu0 0.0
  %1052 = vmatpush1.msra.mxu0 0.0
  %1053 = vmatprep.subr.mxu0 0.0
  %1054 = vmatpush1.msra.mxu0 0.0
  %1055 = vmatprep.subr.mxu0 0.0
  %1056 = vmatpush1.msra.mxu0 0.0
  %1057 = vmatprep.subr.mxu0 0.0
  %1058 = vmatpush1.msra.mxu0 0.0
  %1059 = vmatprep.subr.mxu0 0.0
  %1060 = vmatpush1.msra.mxu0 0.0
  %1061 = vmatprep.subr.mxu0 0.0
  %1062 = vmatpush1.msra.mxu0 0.0
  %1063 = vmatprep.subr.mxu0 0.0
  %1064 = vmatpush1.msra.mxu0 0.0
  %1065 = vmatprep.subr.mxu0 0.0
  %1066 = vmatpush1.msra.mxu0 0.0
  %1067 = vmatprep.subr.mxu0 0.0
  %1068 = vmatpush1.msra.mxu0 0.0
  %1069 = vmatprep.subr.mxu0 0.0
  %1070 = vmatpush1.msra.mxu0 0.0
  %1071 = vmatprep.subr.mxu0 0.0
  %1072 = vmatpush1.msra.mxu0 0.0
  %1073 = vmatprep.subr.mxu0 0.0
  %1074 = vmatpush1.msra.mxu0 0.0
  %1075 = vmatprep.subr.mxu0 0.0
  %1076 = vmatpush1.msra.mxu0 0.0
  %1077 = vmatprep.mubr.f32.mxu0 0.0
  %1078 = vmatmul.mubr.f32.gmra.mrb[0].mxu0 %v1011
  %v1079 = vpop.f32.mrb[0].mxu0
  %v1080 = vadd.f32 0.0, %v1079
  %v1081 = vpop.f32.mrb[0].mxu0
  %1082 = vdwg.mxu0
  %v1083 = vadd.f32 %v589, %v1080
  %v1084 = vld [vmem:[%s8 + $0x5] ss:$0 sm:$0xff]
  %v1085 = vadd.f32 %v1083, %v1084
  %v1086 = vld [vmem:[%s8 + $0x13] ss:$0 sm:$0xff]
  %v1087 = vld [vmem:[%s8 + $0x14] ss:$0 sm:$0xff]
  %v1088 = vsel %vm573, %v1085, 0.0
  %1089 = vadd.xlane.f32.xlu0 %v1088
  %v1090 = vpop.xlane.xlu0 %1089
  %v1091 = vmul.f32 %v1090, %v577
  %v1092 = vsub.f32 %v1085, %v1091
  %v1093 = vmul.f32 %v1092, %v1092
  %v1094 = vsel %vm573, %v1093, 0.0
  %1095 = vadd.xlane.f32.xlu0 %v1094
  %v1096 = vpop.xlane.xlu0 %1095
  %v1097 = vmul.f32 %v1096, %v577
  %v1098 = vadd.f32 %v1097, 1e-05
  %v1099 = vrsqrt.pop %v1098
  %v1100 = vmul.f32 %v1092, %v1099
  %v1101 = vmul.f32 %v1100, %v1086
  %v1102 = vadd.f32 %v1101, %v1087
  %v1103 = vld [vmem:[%s5 + $0x8] sm:$0xff]
  %v1104 = vld [vmem:[%s5 + $0x10] sm:$0xff]
  %v1105 = vld [vmem:[%s5 + $0x30] sm:$0xff]
  %v1106 = vld [vmem:[%s5 + $0x38] sm:$0xff]
  %v1107 = vld [vmem:[%s5 + $0x58] sm:$0xff]
  %v1108 = vld [vmem:[%s5 + $0x60] sm:$0xff]
  %v1109 = vld [vmem:[%s5 + $0x80] sm:$0xff]
  %v1110 = vld [vmem:[%s5 + $0x88] sm:$0xff]
  %s1111 = scalar_lea.vmem %s8, 2
  %v1112 = vld [vmem:[%s1111] ss:$8 sm:$0x3]
  %v1114 = vlaneseq
  %v1115 = vshrl.u32 %v1114, 7
  %v1116 = vsub.s32 0, %v1115
  %v1117 = vrot.slane %v1112, %v1116
  %v1118 = vlaneseq
  %v1119 = vshrl.u32 %v1118, 7
  %v1120 = vsub.s32 1, %v1119
  %v1121 = vrot.slane %v1112, %v1120
  %1132 = vrot.lane.b32.xlu0 %v1103, 64
  %v1133 = vpop.permute.xlu0 %1132
  %1134 = vrot.lane.b32.xlu0 %v1104, 64
  %v1135 = vpop.permute.xlu0 %1134
  %1136 = vrot.lane.b32.xlu0 %v1105, 64
  %v1137 = vpop.permute.xlu0 %1136
  %1138 = vrot.lane.b32.xlu0 %v1106, 64
  %v1139 = vpop.permute.xlu0 %1138
  %1140 = vrot.lane.b32.xlu0 %v1107, 64
  %v1141 = vpop.permute.xlu0 %1140
  %1142 = vrot.lane.b32.xlu0 %v1108, 64
  %v1143 = vpop.permute.xlu0 %1142
  %1144 = vrot.lane.b32.xlu0 %v1109, 64
  %v1145 = vpop.permute.xlu0 %1144
  %1146 = vrot.lane.b32.xlu0 %v1110, 64
  %v1147 = vpop.permute.xlu0 %1146
  %v1148 = vsel %vm797, %v1133, %v1135
  %v1149 = vsel %vm797, %v1135, %v479
  %v1150 = vsel %vm797, %v1137, %v1139
  %v1151 = vsel %vm797, %v1139, %v481
  %v1152 = vsel %vm797, %v1141, %v1143
  %v1153 = vsel %vm797, %v1143, %v483
  %v1154 = vsel %vm797, %v1145, %v1147
  %v1155 = vsel %vm797, %v1147, %v485
  %v1165 = vsel %vm40, %v1102, 0
  %1167 = vmatprep.subr.mxu0 %v1149
  %1168 = vmatpush1.msra.mxu0 %v1148
  %1169 = vmatprep.subr.mxu0 %v1151
  %1170 = vmatpush1.msra.mxu0 %v1150
  %1171 = vmatprep.subr.mxu0 %v1153
  %1172 = vmatpush1.msra.mxu0 %v1152
  %1173 = vmatprep.subr.mxu0 %v1155
  %1174 = vmatpush1.msra.mxu0 %v1154
  %1175 = vmatprep.subr.mxu0 0.0
  %1176 = vmatpush1.msra.mxu0 0.0
  %1177 = vmatprep.subr.mxu0 0.0
  %1178 = vmatpush1.msra.mxu0 0.0
  %1179 = vmatprep.subr.mxu0 0.0
  %1180 = vmatpush1.msra.mxu0 0.0
  %1181 = vmatprep.subr.mxu0 0.0
  %1182 = vmatpush1.msra.mxu0 0.0
  %1183 = vmatprep.subr.mxu0 0.0
  %1184 = vmatpush1.msra.mxu0 0.0
  %1185 = vmatprep.subr.mxu0 0.0
  %1186 = vmatpush1.msra.mxu0 0.0
  %1187 = vmatprep.subr.mxu0 0.0
  %1188 = vmatpush1.msra.mxu0 0.0
  %1189 = vmatprep.subr.mxu0 0.0
  %1190 = vmatpush1.msra.mxu0 0.0
  %1191 = vmatprep.subr.mxu0 0.0
  %1192 = vmatpush1.msra.mxu0 0.0
  %1193 = vmatprep.subr.mxu0 0.0
  %1194 = vmatpush1.msra.mxu0 0.0
  %1195 = vmatprep.subr.mxu0 0.0
  %1196 = vmatpush1.msra.mxu0 0.0
  %1197 = vmatprep.subr.mxu0 0.0
  %1198 = vmatpush1.msra.mxu0 0.0
  %1199 = vmatprep.subr.mxu0 0.0
  %1200 = vmatpush1.msra.mxu0 0.0
  %1201 = vmatprep.subr.mxu0 0.0
  %1202 = vmatpush1.msra.mxu0 0.0
  %1203 = vmatprep.subr.mxu0 0.0
  %1204 = vmatpush1.msra.mxu0 0.0
  %1205 = vmatprep.subr.mxu0 0.0
  %1206 = vmatpush1.msra.mxu0 0.0
  %1207 = vmatprep.subr.mxu0 0.0
  %1208 = vmatpush1.msra.mxu0 0.0
  %1209 = vmatprep.subr.mxu0 0.0
  %1210 = vmatpush1.msra.mxu0 0.0
  %1211 = vmatprep.subr.mxu0 0.0
  %1212 = vmatpush1.msra.mxu0 0.0
  %1213 = vmatprep.subr.mxu0 0.0
  %1214 = vmatpush1.msra.mxu0 0.0
  %1215 = vmatprep.subr.mxu0 0.0
  %1216 = vmatpush1.msra.mxu0 0.0
  %1217 = vmatprep.subr.mxu0 0.0
  %1218 = vmatpush1.msra.mxu0 0.0
  %1219 = vmatprep.subr.mxu0 0.0
  %1220 = vmatpush1.msra.mxu0 0.0
  %1221 = vmatprep.subr.mxu0 0.0
  %1222 = vmatpush1.msra.mxu0 0.0
  %1223 = vmatprep.subr.mxu0 0.0
  %1224 = vmatpush1.msra.mxu0 0.0
  %1225 = vmatprep.subr.mxu0 0.0
  %1226 = vmatpush1.msra.mxu0 0.0
  %1227 = vmatprep.subr.mxu0 0.0
  %1228 = vmatpush1.msra.mxu0 0.0
  %1229 = vmatprep.subr.mxu0 0.0
  %1230 = vmatpush1.msra.mxu0 0.0
  %1231 = vmatprep.mubr.f32.mxu0 0.0
  %1232 = vmatmul.mubr.f32.gmra.mrb[0].mxu0 %v1165
  %v1233 = vpop.f32.mrb[0].mxu0
  %v1234 = vadd.f32 %v1117, %v1233
  %v1235 = vpop.f32.mrb[0].mxu0
  %v1236 = vadd.f32 %v1121, %v1235
  %1237 = vdwg.mxu0
  %v1238 = vmul.f32 %v1234, 0.5
  %v1239 = vmul.f32 %v1234, 0.044715
  %v1240 = vmul.f32 %v1239, %v1234
  %v1241 = vmul.f32 %v1240, %v1234
  %v1242 = vadd.f32 %v1234, %v1241
  %v1243 = vmul.f32 %v1242, 0.7978846
  %v1244 = vtanh.pop %v1243
  %v1245 = vadd.f32 %v1244, 1.0
  %v1246 = vmul.f32 %v1238, %v1245
  %v1247 = vld [vmem:[%s6 + $0x40] sm:$0xff]
  %v1248 = vld [vmem:[%s6 + $0x48] sm:$0xff]
  %v1249 = vld [vmem:[%s6 + $0x50] sm:$0xff]
  %v1250 = vld [vmem:[%s6 + $0x58] sm:$0xff]
  %v1251 = vld [vmem:[%s6 + $0x60] sm:$0xff]
  %v1252 = vld [vmem:[%s6 + $0x68] sm:$0xff]
  %v1253 = vld [vmem:[%s6 + $0x70] sm:$0xff]
  %v1254 = vld [vmem:[%s6 + $0x78] sm:$0xff]
  %v1255 = vld [vmem:[%s6 + $0x80] sm:$0xff]
  %v1256 = vld [vmem:[%s6 + $0x88] sm:$0xff]
  %v1257 = vld [vmem:[%s6 + $0x90] sm:$0xff]
  %v1258 = vld [vmem:[%s6 + $0x98] sm:$0xff]
  %v1259 = vld [vmem:[%s6 + $0xa0] sm:$0xff]
  %v1260 = vld [vmem:[%s6 + $0xa8] sm:$0xff]
  %v1261 = vld [vmem:[%s6 + $0xb0] sm:$0xff]
  %v1262 = vld [vmem:[%s6 + $0xb8] sm:$0xff]
  %v1263 = vld [vmem:[%s8 + $0x6] ss:$0 sm:$0xff]
  %1264 = vmatprep.subr.mxu0 0.0
  %1265 = vmatpush1.msra.mxu0 %v1247
  %1266 = vmatprep.subr.mxu0 0.0
  %1267 = vmatpush1.msra.mxu0 %v1248
  %1268 = vmatprep.subr.mxu0 0.0
  %1269 = vmatpush1.msra.mxu0 %v1249
  %1270 = vmatprep.subr.mxu0 0.0
  %1271 = vmatpush1.msra.mxu0 %v1250
  %1272 = vmatprep.subr.mxu0 0.0
  %1273 = vmatpush1.msra.mxu0 %v1251
  %1274 = vmatprep.subr.mxu0 0.0
  %1275 = vmatpush1.msra.mxu0 %v1252
  %1276 = vmatprep.subr.mxu0 0.0
  %1277 = vmatpush1.msra.mxu0 %v1253
  %1278 = vmatprep.subr.mxu0 0.0
  %1279 = vmatpush1.msra.mxu0 %v1254
  %1280 = vmatprep.subr.mxu0 0.0
  %1281 = vmatpush1.msra.mxu0 %v1255
  %1282 = vmatprep.subr.mxu0 0.0
  %1283 = vmatpush1.msra.mxu0 %v1256
  %1284 = vmatprep.subr.mxu0 0.0
  %1285 = vmatpush1.msra.mxu0 %v1257
  %1286 = vmatprep.subr.mxu0 0.0
  %1287 = vmatpush1.msra.mxu0 %v1258
  %1288 = vmatprep.subr.mxu0 0.0
  %1289 = vmatpush1.msra.mxu0 %v1259
  %1290 = vmatprep.subr.mxu0 0.0
  %1291 = vmatpush1.msra.mxu0 %v1260
  %1292 = vmatprep.subr.mxu0 0.0
  %1293 = vmatpush1.msra.mxu0 %v1261
  %1294 = vmatprep.subr.mxu0 0.0
  %1295 = vmatpush1.msra.mxu0 %v1262
  %1296 = vmatprep.subr.mxu0 0.0
  %1297 = vmatpush1.msra.mxu0 0.0
  %1298 = vmatprep.subr.mxu0 0.0
  %1299 = vmatpush1.msra.mxu0 0.0
  %1300 = vmatprep.subr.mxu0 0.0
  %1301 = vmatpush1.msra.mxu0 0.0
  %1302 = vmatprep.subr.mxu0 0.0
  %1303 = vmatpush1.msra.mxu0 0.0
  %1304 = vmatprep.subr.mxu0 0.0
  %1305 = vmatpush1.msra.mxu0 0.0
  %1306 = vmatprep.subr.mxu0 0.0
  %1307 = vmatpush1.msra.mxu0 0.0
  %1308 = vmatprep.subr.mxu0 0.0
  %1309 = vmatpush1.msra.mxu0 0.0
  %1310 = vmatprep.subr.mxu0 0.0
  %1311 = vmatpush1.msra.mxu0 0.0
  %1312 = vmatprep.subr.mxu0 0.0
  %1313 = vmatpush1.msra.mxu0 0.0
  %1314 = vmatprep.subr.mxu0 0.0
  %1315 = vmatpush1.msra.mxu0 0.0
  %1316 = vmatprep.subr.mxu0 0.0
  %1317 = vmatpush1.msra.mxu0 0.0
  %1318 = vmatprep.subr.mxu0 0.0
  %1319 = vmatpush1.msra.mxu0 0.0
  %1320 = vmatprep.subr.mxu0 0.0
  %1321 = vmatpush1.msra.mxu0 0.0
  %1322 = vmatprep.subr.mxu0 0.0
  %1323 = vmatpush1.msra.mxu0 0.0
  %1324 = vmatprep.subr.mxu0 0.0
  %1325 = vmatpush1.msra.mxu0 0.0
  %1326 = vmatprep.subr.mxu0 0.0
  %1327 = vmatpush1.msra.mxu0 0.0
  %1328 = vmatprep.mubr.f32.mxu0 0.0
  %1329 = vmatmul.mubr.f32.gmra.mrb[0].mxu0 %v1246
  %v1330 = vpop.f32.mrb[0].mxu0
  %v1331 = vadd.f32 %v1263, %v1330
  %v1332 = vpop.f32.mrb[0].mxu0
  %1333 = vdwg.mxu0
  %v1334 = vxor.u32 %v1236, 2147483648
  %v1335 = vmul.f32 %v1334, 1.442695
  %v1336 = vpow.pop %v1335
  %v1337 = vadd.f32 %v1336, 1.0
  %v1338 = vrcp.pop %v1337
  %v1339 = vmul.f32 1.0, %v1338
  %vm1340 = vcmp.gt.f32.partialorder %v1339, 0.5
  %v1341 = vsel %vm1340, 1, 0
  %v1342 = vcvt.s32.f32 %v1341
  %v1343 = vmul.f32 %v1331, %v1342
  %1345 = vrot.lane.b32.xlu0 %v1343, 32
  %v1346 = vpop.permute.xlu0 %1345
  %v1348 = vmul.f32 %v1339, %v1346
  %1350 = vrot.lane.b32.xlu0 %v1348, 96
  %v1351 = vpop.permute.xlu0 %1350
  %v1353 = vadd.f32 %v1102, %v1351
  %v1354 = vld [vmem:[%s8 + $0x15] ss:$0 sm:$0xff]
  %v1355 = vld [vmem:[%s8 + $0x16] ss:$0 sm:$0xff]
  %v1356 = vsel %vm573, %v1353, 0.0
  %1357 = vadd.xlane.f32.xlu0 %v1356
  %v1358 = vpop.xlane.xlu0 %1357
  %v1359 = vmul.f32 %v1358, %v577
  %v1360 = vsub.f32 %v1353, %v1359
  %v1361 = vmul.f32 %v1360, %v1360
  %v1362 = vsel %vm573, %v1361, 0.0
  %1363 = vadd.xlane.f32.xlu0 %v1362
  %v1364 = vpop.xlane.xlu0 %1363
  %v1365 = vmul.f32 %v1364, %v577
  %v1366 = vadd.f32 %v1365, 1e-05
  %v1367 = vrsqrt.pop %v1366
  %v1368 = vmul.f32 %v1360, %v1367
  %v1369 = vmul.f32 %v1368, %v1354
  %v1370 = vadd.f32 %v1369, %v1355
  %1371 = vrot.lane.b32.xlu0 %v1009, 32
  %v1372 = vpop.permute.xlu0 %1371
  %1375 = vrot.lane.b32.xlu0 %v1342, 64
  %v1376 = vpop.permute.xlu0 %1375
  %1378 = vrot.lane.b32.xlu0 %v704, 96
  %v1379 = vpop.permute.xlu0 %1378
  %v1381 = vsel %vm40, %v1370, %v1372
  %v1382 = vsel %vm797, %v1381, %v1376
  %vm1383 = vcmask 785408
  %v1384 = vsel %vm1383, %v1382, %v1379
  %vm1385 = vcmask 850944
  %v1386 = vsel %vm1385, %v1384, 0.0
  %1387 = vst [vmem:[%s9] sm:$0x3] %v1386
  // Predicated region
  $region38: #{_device_step.1} parent=0 // pred_check
    _
  $region39: #{_device_step.1} parent=0 // pred_check_branch
    %1389 = sbr.rel (0) target = $region41
  $region40: #{_device_step.1} parent=0 // pred_region
    _
  $region41: #{_device_step.1} parent=0 // pred_fallthru
    _
  // Predicated region
  $region42: #{_device_step.1} parent=0 // pred_check
    _
  $region43: #{_device_step.1} parent=0 // pred_check_branch
    %1391 = sbr.rel (0) target = $region45
  $region44: #{_device_step.1} parent=0 // pred_region
    _
  $region45: #{_device_step.1} parent=0 // pred_fallthru
    _

</llo_original>
